<compile_context>
chip_gen: v5e
topology: v5e:2x2
jax: 0.10.0
libtpu: 0.0.40
codegen_flags: <defaults>
</compile_context>

<pallas_src>
import jax
import jax.numpy as jnp
from jax.experimental import pallas as pl
from jax.experimental.pallas import tpu as pltpu

LATENT_DIM = 2
HIDDEN = 1024
OUT = 784
BATCH_TILE = 512       # rows per grid step for large batches


def _round_up(x, m):
    return (x + m - 1) // m * m


def _choose_batch_tiling(B):
    """Pick (padded_batch, tile) so tiles are sublane-aligned, <= BATCH_TILE,
    and the grid has >= 2 steps whenever the batch allows (v7x: 2 TCs)."""
    b_pad = _round_up(B, 8)
    tb = min(BATCH_TILE, _round_up(pl.cdiv(b_pad, 2), 8))
    tb = max(tb, 8)
    b_pad = _round_up(b_pad, tb)
    return b_pad, tb


def _decoder_kernel(z_ref, w1_ref, b1_ref, w2_ref, b2_ref, o_ref):
    # ---- fc1: K = LATENT_DIM = 2 -> VPU outer product, not the MXU ----
    z = z_ref[...]                       # (tb, LATENT_DIM) f32
    w1 = w1_ref[...]                     # (LATENT_DIM, HIDDEN) f32
    h = z[:, 0:1] * w1[0:1, :]
    for k in range(1, LATENT_DIM):       # unrolled at trace time (LATENT_DIM=2)
        h = h + z[:, k:k + 1] * w1[k:k + 1, :]
    h = h + b1_ref[...]

    # Softplus, numerically stable, kept in f32 (portable incl. v5e).
    h = jnp.logaddexp(jnp.float32(0.0), h)

    # ---- fc2 on the MXU: bf16 operands, f32 accumulation ----
    y = jnp.dot(h.astype(jnp.bfloat16), w2_ref[...],
                preferred_element_type=jnp.float32)
    y = y + b2_ref[...]

    # Sigmoid via tanh: single EUP op per element, exact (no approx recip).
    o_ref[...] = (0.5 * (jnp.tanh(0.5 * y) + 1.0)).astype(o_ref.dtype)


def prepare_params(w1, b1, w2, b2):
    """One-time conversion of decoder params into kernel-ready layout.

    w1: (LATENT_DIM, HIDDEN) f32
    b1: (1, HIDDEN)          f32
    w2: (HIDDEN, OUT)        bf16 (f32 MXU accumulation in-kernel)
    b2: (1, OUT)             f32
    """
    w1 = jnp.asarray(w1, jnp.float32).reshape(LATENT_DIM, HIDDEN)
    b1 = jnp.asarray(b1, jnp.float32).reshape(1, HIDDEN)
    w2 = jnp.asarray(w2, jnp.float32).reshape(HIDDEN, OUT).astype(jnp.bfloat16)
    b2 = jnp.asarray(b2, jnp.float32).reshape(1, OUT)
    return w1, b1, w2, b2


def decoder_forward(z, params):
    """Decoder forward pass. `z`: (B, LATENT_DIM) f32. Returns (B, OUT) f32."""
    w1, b1, w2, b2 = params
    B = z.shape[0]

    b_pad, tb = _choose_batch_tiling(B)
    z_p = z if b_pad == B else jnp.pad(z, ((0, b_pad - B), (0, 0)))
    grid = (b_pad // tb,)

    resident = pl.Buffered(1)   # constant index_map -> no second buffer needed

    out = pl.pallas_call(
        _decoder_kernel,
        out_shape=jax.ShapeDtypeStruct((b_pad, OUT), jnp.float32),
        grid=grid,
        in_specs=[
            pl.BlockSpec((tb, LATENT_DIM), lambda i: (i, 0)),        # z tile
            pl.BlockSpec((LATENT_DIM, HIDDEN), lambda i: (0, 0),     # w1
                         pipeline_mode=resident),
            pl.BlockSpec((1, HIDDEN), lambda i: (0, 0),              # b1
                         pipeline_mode=resident),
            pl.BlockSpec((HIDDEN, OUT), lambda i: (0, 0),            # w2 bf16
                         pipeline_mode=resident),
            pl.BlockSpec((1, OUT), lambda i: (0, 0),                 # b2
                         pipeline_mode=resident),
        ],
        out_specs=pl.BlockSpec((tb, OUT), lambda i: (i, 0)),
        compiler_params=pltpu.CompilerParams(
            dimension_semantics=("parallel",),   # batch split across TCs (v7x)
            vmem_limit_bytes=32 << 20,           # tb=512 uses ~8 MiB; headroom
        ),
    )(z_p, w1, b1, w2, b2)

    # Row un-pad only when the batch needed padding (column slice eliminated).
    return out if b_pad == B else out[:B]


def init_params(key):
    """Deterministic init mimicking nn.Linear's U(-1/sqrt(fan_in), 1/sqrt(fan_in))."""
    k1, k2, k3, k4 = jax.random.split(key, 4)
    bound1 = 1.0 / jnp.sqrt(LATENT_DIM)
    bound2 = 1.0 / jnp.sqrt(HIDDEN)
    w1 = jax.random.uniform(k1, (LATENT_DIM, HIDDEN), jnp.float32, -bound1, bound1)
    b1 = jax.random.uniform(k2, (1, HIDDEN), jnp.float32, -bound1, bound1)
    w2 = jax.random.uniform(k3, (HIDDEN, OUT), jnp.float32, -bound2, bound2)
    b2 = jax.random.uniform(k4, (1, OUT), jnp.float32, -bound2, bound2)
    return w1, b1, w2, b2


def _reference(z, w1, b1, w2, b2):
    """Pure-JAX reference mirroring the kernel's bf16 fc2 quantization."""
    h = jax.nn.softplus(z @ w1 + b1)
    h_q = h.astype(jnp.bfloat16).astype(jnp.float32)
    w2_q = w2.astype(jnp.bfloat16).astype(jnp.float32)
    return jax.nn.sigmoid(h_q @ w2_q + b2)


if __name__ == "__main__":
    key = jax.random.PRNGKey(0)
    kz, kp = jax.random.split(key)

    B = 2
    z = jax.random.normal(kz, (B, LATENT_DIM), jnp.float32)
    w1, b1, w2, b2 = init_params(kp)
    params = prepare_params(w1, b1, w2, b2)

    out = decoder_forward(z, params)
    jax.block_until_ready(out)

    ref = _reference(z, w1, b1, w2, b2)
    assert out.shape == (B, OUT), out.shape
    max_err = float(jnp.max(jnp.abs(out - ref)))
    # Tolerance covers bf16 fc2 quantization + MXU accumulation order.
    assert max_err < 5e-3, max_err
    print("KERNEL_OK")
</pallas_src>

<mosaic_0001>
module attributes {stable_mosaic.version = 11 : i64} {
  func.func @_decoder_kernel(%arg0: i32, %arg1: memref<8x2xf32, #tpu.memory_space<vmem>>, %arg2: memref<2x1024xf32, #tpu.memory_space<vmem>>, %arg3: memref<1x1024xf32, #tpu.memory_space<vmem>>, %arg4: memref<1024x784xbf16, #tpu.memory_space<vmem>>, %arg5: memref<1x784xf32, #tpu.memory_space<vmem>>, %arg6: memref<8x784xf32, #tpu.memory_space<vmem>>) attributes {dimension_semantics = [#tpu.dimension_semantics<parallel>], iteration_bounds = array<i64: 1>, scalar_prefetch = 0 : i64, scratch_operands = 0 : i64, tpu.core_type = #tpu.core_type<tc>, window_params = [{transform_indices = @transform_0, window_bounds = array<i64: 8, 2>}, {pipeline_mode = #tpu.pipeline_mode<synchronous>, transform_indices = @transform_1, window_bounds = array<i64: 2, 1024>}, {pipeline_mode = #tpu.pipeline_mode<synchronous>, transform_indices = @transform_2, window_bounds = array<i64: 1, 1024>}, {pipeline_mode = #tpu.pipeline_mode<synchronous>, transform_indices = @transform_3, window_bounds = array<i64: 1024, 784>}, {pipeline_mode = #tpu.pipeline_mode<synchronous>, transform_indices = @transform_4, window_bounds = array<i64: 1, 784>}, {transform_indices = @transform_5, window_bounds = array<i64: 8, 784>}]} {
    %c0 = arith.constant 0 : index
    %c0_0 = arith.constant 0 : index
    %0 = vector.load %arg1[%c0, %c0_0] : memref<8x2xf32, #tpu.memory_space<vmem>>, vector<8x2xf32>
    %c0_1 = arith.constant 0 : index
    %c0_2 = arith.constant 0 : index
    %1 = vector.load %arg2[%c0_1, %c0_2] : memref<2x1024xf32, #tpu.memory_space<vmem>>, vector<2x1024xf32>
    %2 = vector.extract_strided_slice %0 {offsets = [0, 0], sizes = [8, 1], strides = [1, 1]} : vector<8x2xf32> to vector<8x1xf32>
    %3 = vector.extract_strided_slice %1 {offsets = [0, 0], sizes = [1, 1024], strides = [1, 1]} : vector<2x1024xf32> to vector<1x1024xf32>
    %4 = vector.broadcast %2 : vector<8x1xf32> to vector<8x1024xf32>
    %5 = vector.broadcast %3 : vector<1x1024xf32> to vector<8x1024xf32>
    %6 = arith.mulf %4, %5 : vector<8x1024xf32>
    %7 = vector.extract_strided_slice %0 {offsets = [0, 1], sizes = [8, 1], strides = [1, 1]} : vector<8x2xf32> to vector<8x1xf32>
    %8 = vector.extract_strided_slice %1 {offsets = [1, 0], sizes = [1, 1024], strides = [1, 1]} : vector<2x1024xf32> to vector<1x1024xf32>
    %9 = vector.broadcast %7 : vector<8x1xf32> to vector<8x1024xf32>
    %10 = vector.broadcast %8 : vector<1x1024xf32> to vector<8x1024xf32>
    %11 = arith.mulf %9, %10 : vector<8x1024xf32>
    %12 = arith.addf %6, %11 : vector<8x1024xf32>
    %c0_3 = arith.constant 0 : index
    %c0_4 = arith.constant 0 : index
    %13 = vector.load %arg3[%c0_3, %c0_4] : memref<1x1024xf32, #tpu.memory_space<vmem>>, vector<1x1024xf32>
    %14 = vector.broadcast %13 : vector<1x1024xf32> to vector<8x1024xf32>
    %15 = arith.addf %12, %14 : vector<8x1024xf32>
    %cst = arith.constant 0.000000e+00 : f32
    %16 = vector.broadcast %cst : f32 to vector<8x1024xf32>
    %17 = arith.maximumf %16, %15 : vector<8x1024xf32>
    %18 = vector.broadcast %cst : f32 to vector<8x1024xf32>
    %19 = arith.subf %18, %15 : vector<8x1024xf32>
    %20 = arith.cmpf one, %19, %19 : vector<8x1024xf32>
    %21 = vector.broadcast %cst : f32 to vector<8x1024xf32>
    %22 = arith.addf %21, %15 : vector<8x1024xf32>
    %23 = math.absf %19 : vector<8x1024xf32>
    %cst_5 = arith.constant 0.000000e+00 : f32
    %24 = vector.broadcast %cst_5 : f32 to vector<8x1024xf32>
    %25 = arith.subf %24, %23 : vector<8x1024xf32>
    %26 = math.exp %25 : vector<8x1024xf32>
    %27 = math.log1p %26 : vector<8x1024xf32>
    %28 = arith.addf %17, %27 : vector<8x1024xf32>
    %29 = arith.select %20, %22, %28 : vector<8x1024xi1>, vector<8x1024xf32>
    %30 = arith.truncf %29 : vector<8x1024xf32> to vector<8x1024xbf16>
    %c0_6 = arith.constant 0 : index
    %c0_7 = arith.constant 0 : index
    %31 = vector.load %arg4[%c0_6, %c0_7] : memref<1024x784xbf16, #tpu.memory_space<vmem>>, vector<1024x784xbf16>
    %cst_8 = arith.constant dense<0.000000e+00> : vector<8x784xf32>
    %32 = tpu.matmul %30, %31, %cst_8 {dimension_numbers = #tpu.dot_dimension_numbers<[1], [0], [0], [1], [0, 0, 1, 1], [], []>} : vector<8x1024xbf16>, vector<1024x784xbf16>, vector<8x784xf32> -> vector<8x784xf32>
    %c0_9 = arith.constant 0 : index
    %c0_10 = arith.constant 0 : index
    %33 = vector.load %arg5[%c0_9, %c0_10] : memref<1x784xf32, #tpu.memory_space<vmem>>, vector<1x784xf32>
    %34 = vector.broadcast %33 : vector<1x784xf32> to vector<8x784xf32>
    %35 = arith.addf %32, %34 : vector<8x784xf32>
    %cst_11 = arith.constant 5.000000e-01 : f32
    %36 = vector.broadcast %cst_11 : f32 to vector<8x784xf32>
    %37 = arith.mulf %36, %35 : vector<8x784xf32>
    %38 = math.tanh %37 : vector<8x784xf32>
    %cst_12 = arith.constant 1.000000e+00 : f32
    %39 = vector.broadcast %cst_12 : f32 to vector<8x784xf32>
    %40 = arith.addf %38, %39 : vector<8x784xf32>
    %cst_13 = arith.constant 5.000000e-01 : f32
    %41 = vector.broadcast %cst_13 : f32 to vector<8x784xf32>
    %42 = arith.mulf %41, %40 : vector<8x784xf32>
    %c0_14 = arith.constant 0 : index
    %c0_15 = arith.constant 0 : index
    %43 = vector.load %arg6[%c0_14, %c0_15] : memref<8x784xf32, #tpu.memory_space<vmem>>, vector<8x784xf32>
    tpu.vector_store %arg6[%c0_14, %c0_15], %42 {strides = array<i32>} : memref<8x784xf32, #tpu.memory_space<vmem>>, vector<8x784xf32>,
    return
  }
  func.func @transform_0(%arg0: i32) -> (i32, i32) {
    %c0_i32 = arith.constant 0 : i32
    %c0_i32_0 = arith.constant 0 : i32
    return %arg0, %c0_i32 : i32, i32
  }
  func.func @transform_1(%arg0: i32) -> (i32, i32) {
    %c0_i32 = arith.constant 0 : i32
    %c0_i32_0 = arith.constant 0 : i32
    %c0_i32_1 = arith.constant 0 : i32
    return %c0_i32, %c0_i32_0 : i32, i32
  }
  func.func @transform_2(%arg0: i32) -> (i32, i32) {
    %c0_i32 = arith.constant 0 : i32
    %c0_i32_0 = arith.constant 0 : i32
    %c0_i32_1 = arith.constant 0 : i32
    return %c0_i32, %c0_i32_0 : i32, i32
  }
  func.func @transform_3(%arg0: i32) -> (i32, i32) {
    %c0_i32 = arith.constant 0 : i32
    %c0_i32_0 = arith.constant 0 : i32
    %c0_i32_1 = arith.constant 0 : i32
    return %c0_i32, %c0_i32_0 : i32, i32
  }
  func.func @transform_4(%arg0: i32) -> (i32, i32) {
    %c0_i32 = arith.constant 0 : i32
    %c0_i32_0 = arith.constant 0 : i32
    %c0_i32_1 = arith.constant 0 : i32
    return %c0_i32, %c0_i32_0 : i32, i32
  }
  func.func @transform_5(%arg0: i32) -> (i32, i32) {
    %c0_i32 = arith.constant 0 : i32
    %c0_i32_0 = arith.constant 0 : i32
    return %arg0, %c0_i32 : i32, i32
  }
}

</mosaic_0001>

<llo_original>
// kernel: tpu_custom_call.1
$region0: #{tpu_custom_call.1}
  #allocation0 [shape = 'u32[]', space=smem, size = 0x4, offset = 0x4, fixed_abs, tag = 'smem constant byte address 0x4 - core index']
  #allocation1 [shape = 'u32[72,128]{1,0:T(1,128)}', space=vmem, size = 0x9000, scoped, tag = 'internal scratch']
  %s0 = inlined_call_operand.vmem [shape: f32[8,2], index: 0, kind: input, shape index: {}]
  %s1 = inlined_call_operand.vmem [shape: f32[2,1024], index: 1, kind: input, shape index: {}]
  %s2 = inlined_call_operand.vmem [shape: f32[1,1024], index: 2, kind: input, shape index: {}]
  %s3 = inlined_call_operand.vmem [shape: bf16[1024,784], index: 3, kind: input, shape index: {}]
  %s4 = inlined_call_operand.vmem [shape: f32[1,784], index: 4, kind: input, shape index: {}]
  %s5 = inlined_call_operand.hbm [shape: f32[8,784], index: 5, kind: output, shape index: {}]
  %s6 = sld [smem:[#allocation0]]
  $region30: #{tpu_custom_call.1} parent=0
    _
  %s8 = ssub.s32 1, %s6
  %s9 = scalar_select 0, %s8, %s6
  $region1: #{tpu_custom_call.1} parent=0
    #allocation2 [shape = 'u8[28672]{0}', space=vmem, size = 0x7000, scoped, tag = 'output window, operand 0, single buffered']
    #allocation3 [shape = 's32[1]{0}', space=sflag, size = 0x4, scoped, tag = 'scoped memory for tpu_custom_call.1']
    %10 = vsyncpa [#allocation3], 0
    // Predicated region
    $region2: #{tpu_custom_call.1} parent=1 // pred_check
      _
    $region3: #{tpu_custom_call.1} parent=1 // pred_check_branch
      %12 = sbr.rel (0) target = $region5
    $region4: #{tpu_custom_call.1} parent=1 // pred_region
      _
    $region5: #{tpu_custom_call.1} parent=1 // pred_fallthru
      _
    // Predicated region
    $region6: #{tpu_custom_call.1} parent=1 // pred_check
      _
    $region7: #{tpu_custom_call.1} parent=1 // pred_check_branch
      %14 = sbr.rel (0) target = $region9
    $region8: #{tpu_custom_call.1} parent=1 // pred_region
      _
    $region9: #{tpu_custom_call.1} parent=1 // pred_fallthru
      _
    // Predicated region
    $region10: #{tpu_custom_call.1} parent=1 // pred_check
      _
    $region11: #{tpu_custom_call.1} parent=1 // pred_check_branch
      %16 = sbr.rel (0) target = $region13
    $region12: #{tpu_custom_call.1} parent=1 // pred_region
      _
    $region13: #{tpu_custom_call.1} parent=1 // pred_fallthru
      _
    // Predicated region
    $region14: #{tpu_custom_call.1} parent=1 // pred_check
      _
    $region15: #{tpu_custom_call.1} parent=1 // pred_check_branch
      %18 = sbr.rel (0) target = $region17
    $region16: #{tpu_custom_call.1} parent=1 // pred_region
      _
    $region17: #{tpu_custom_call.1} parent=1 // pred_fallthru
      _
    // Predicated region
    $region18: #{tpu_custom_call.1} parent=1 // pred_check
      _
    $region19: #{tpu_custom_call.1} parent=1 // pred_check_branch
      %20 = sbr.rel (0) target = $region21
    $region20: #{tpu_custom_call.1} parent=1 // pred_region
      _
    $region21: #{tpu_custom_call.1} parent=1 // pred_fallthru
      _
    %v21 = vld [vmem:[%s0] sm:$0xff]
    %v22 = vld [vmem:[%s1] sm:$0xff]
    %v23 = vld [vmem:[%s1 + $0x8] sm:$0xff]
    %25 = vset.pattern.permute.xlu0 0
    %26 = vperm.xlu0 %25, %v21
    %v27 = vpop.permute.xlu0 %26
    %v31 = vperm.slane %v22, 0
    %v32 = vperm.slane %v22, 2
    %v33 = vperm.slane %v22, 4
    %v34 = vperm.slane %v22, 6
    %v35 = vperm.slane %v23, 0
    %v36 = vperm.slane %v23, 2
    %v37 = vperm.slane %v23, 4
    %v38 = vperm.slane %v23, 6
    %v47 = vperm.slane %v31, 0
    %v48 = vperm.slane %v32, 0
    %v49 = vperm.slane %v33, 0
    %v50 = vperm.slane %v34, 0
    %v51 = vperm.slane %v35, 0
    %v52 = vperm.slane %v36, 0
    %v53 = vperm.slane %v37, 0
    %v54 = vperm.slane %v38, 0
    %v55 = vmul.f32 %v27, %v47
    %v56 = vmul.f32 %v27, %v48
    %v57 = vmul.f32 %v27, %v49
    %v58 = vmul.f32 %v27, %v50
    %v59 = vmul.f32 %v27, %v51
    %v60 = vmul.f32 %v27, %v52
    %v61 = vmul.f32 %v27, %v53
    %v62 = vmul.f32 %v27, %v54
    %63 = vset.pattern.permute.xlu0 1
    %64 = vperm.xlu0 %63, %v21
    %v65 = vpop.permute.xlu0 %64
    %v67 = vperm.slane %v22, 1
    %v68 = vperm.slane %v22, 3
    %v69 = vperm.slane %v22, 5
    %v70 = vperm.slane %v22, 7
    %v71 = vperm.slane %v23, 1
    %v72 = vperm.slane %v23, 3
    %v73 = vperm.slane %v23, 5
    %v74 = vperm.slane %v23, 7
    %v83 = vperm.slane %v67, 1
    %v84 = vperm.slane %v68, 1
    %v85 = vperm.slane %v69, 1
    %v86 = vperm.slane %v70, 1
    %v87 = vperm.slane %v71, 1
    %v88 = vperm.slane %v72, 1
    %v89 = vperm.slane %v73, 1
    %v90 = vperm.slane %v74, 1
    %v91 = vmul.f32 %v65, %v83
    %v92 = vmul.f32 %v65, %v84
    %v93 = vmul.f32 %v65, %v85
    %v94 = vmul.f32 %v65, %v86
    %v95 = vmul.f32 %v65, %v87
    %v96 = vmul.f32 %v65, %v88
    %v97 = vmul.f32 %v65, %v89
    %v98 = vmul.f32 %v65, %v90
    %v99 = vadd.f32 %v55, %v91
    %v100 = vadd.f32 %v56, %v92
    %v101 = vadd.f32 %v57, %v93
    %v102 = vadd.f32 %v58, %v94
    %v103 = vadd.f32 %v59, %v95
    %v104 = vadd.f32 %v60, %v96
    %v105 = vadd.f32 %v61, %v97
    %v106 = vadd.f32 %v62, %v98
    %v107 = vld [vmem:[%s2] sm:$0xff]
    %v109 = vperm.slane %v107, 0
    %v110 = vperm.slane %v107, 1
    %v111 = vperm.slane %v107, 2
    %v112 = vperm.slane %v107, 3
    %v113 = vperm.slane %v107, 4
    %v114 = vperm.slane %v107, 5
    %v115 = vperm.slane %v107, 6
    %v116 = vperm.slane %v107, 7
    %v125 = vadd.f32 %v99, %v109
    %v126 = vadd.f32 %v100, %v110
    %v127 = vadd.f32 %v101, %v111
    %v128 = vadd.f32 %v102, %v112
    %v129 = vadd.f32 %v103, %v113
    %v130 = vadd.f32 %v104, %v114
    %v131 = vadd.f32 %v105, %v115
    %v132 = vadd.f32 %v106, %v116
    %v133 = vmax.f32 %v125, 0.0
    %v134 = vmax.f32 %v126, 0.0
    %v135 = vmax.f32 %v127, 0.0
    %v136 = vmax.f32 %v128, 0.0
    %v137 = vmax.f32 %v129, 0.0
    %v138 = vmax.f32 %v130, 0.0
    %v139 = vmax.f32 %v131, 0.0
    %v140 = vmax.f32 %v132, 0.0
    %v141 = vsub.f32 0.0, %v125
    %v142 = vsub.f32 0.0, %v126
    %v143 = vsub.f32 0.0, %v127
    %v144 = vsub.f32 0.0, %v128
    %v145 = vsub.f32 0.0, %v129
    %v146 = vsub.f32 0.0, %v130
    %v147 = vsub.f32 0.0, %v131
    %v148 = vsub.f32 0.0, %v132
    %vm149 = vcmp.ne.f32.partialorder %v141, %v141
    %vm150 = vcmp.ne.f32.partialorder %v142, %v142
    %vm151 = vcmp.ne.f32.partialorder %v143, %v143
    %vm152 = vcmp.ne.f32.partialorder %v144, %v144
    %vm153 = vcmp.ne.f32.partialorder %v145, %v145
    %vm154 = vcmp.ne.f32.partialorder %v146, %v146
    %vm155 = vcmp.ne.f32.partialorder %v147, %v147
    %vm156 = vcmp.ne.f32.partialorder %v148, %v148
    %v157 = vadd.f32 %v125, 0.0
    %v158 = vadd.f32 %v126, 0.0
    %v159 = vadd.f32 %v127, 0.0
    %v160 = vadd.f32 %v128, 0.0
    %v161 = vadd.f32 %v129, 0.0
    %v162 = vadd.f32 %v130, 0.0
    %v163 = vadd.f32 %v131, 0.0
    %v164 = vadd.f32 %v132, 0.0
    %v165 = vand.u32 2147483647, %v141
    %v166 = vand.u32 2147483647, %v142
    %v167 = vand.u32 2147483647, %v143
    %v168 = vand.u32 2147483647, %v144
    %v169 = vand.u32 2147483647, %v145
    %v170 = vand.u32 2147483647, %v146
    %v171 = vand.u32 2147483647, %v147
    %v172 = vand.u32 2147483647, %v148
    %v173 = vsub.f32 0.0, %v165
    %v174 = vsub.f32 0.0, %v166
    %v175 = vsub.f32 0.0, %v167
    %v176 = vsub.f32 0.0, %v168
    %v177 = vsub.f32 0.0, %v169
    %v178 = vsub.f32 0.0, %v170
    %v179 = vsub.f32 0.0, %v171
    %v180 = vsub.f32 0.0, %v172
    %v181 = vmul.f32 %v173, 1.442695
    %v182 = vpow.pop %v181
    %v183 = vmul.f32 %v174, 1.442695
    %v184 = vpow.pop %v183
    %v185 = vmul.f32 %v175, 1.442695
    %v186 = vpow.pop %v185
    %v187 = vmul.f32 %v176, 1.442695
    %v188 = vpow.pop %v187
    %v189 = vmul.f32 %v177, 1.442695
    %v190 = vpow.pop %v189
    %v191 = vmul.f32 %v178, 1.442695
    %v192 = vpow.pop %v191
    %v193 = vmul.f32 %v179, 1.442695
    %v194 = vpow.pop %v193
    %v195 = vmul.f32 %v180, 1.442695
    %v196 = vpow.pop %v195
    %v197 = vadd.f32 %v182, 1.0
    %v198 = vlog2.pop %v197
    %v199 = vmul.f32 %v198, 0.6931472
    %v200 = vmul.f32 -0.5, %v182
    %v201 = vadd.f32 %v200, 1.0
    %v202 = vmul.f32 %v201, %v182
    %v203 = vand.u32 2147483647, %v182
    %vm204 = vcmp.lt.f32.partialorder %v203, 0.0004427343
    %v205 = vsel %vm204, %v202, %v199
    %v206 = vadd.f32 %v184, 1.0
    %v207 = vlog2.pop %v206
    %v208 = vmul.f32 %v207, 0.6931472
    %v209 = vmul.f32 -0.5, %v184
    %v210 = vadd.f32 %v209, 1.0
    %v211 = vmul.f32 %v210, %v184
    %v212 = vand.u32 2147483647, %v184
    %vm213 = vcmp.lt.f32.partialorder %v212, 0.0004427343
    %v214 = vsel %vm213, %v211, %v208
    %v215 = vadd.f32 %v186, 1.0
    %v216 = vlog2.pop %v215
    %v217 = vmul.f32 %v216, 0.6931472
    %v218 = vmul.f32 -0.5, %v186
    %v219 = vadd.f32 %v218, 1.0
    %v220 = vmul.f32 %v219, %v186
    %v221 = vand.u32 2147483647, %v186
    %vm222 = vcmp.lt.f32.partialorder %v221, 0.0004427343
    %v223 = vsel %vm222, %v220, %v217
    %v224 = vadd.f32 %v188, 1.0
    %v225 = vlog2.pop %v224
    %v226 = vmul.f32 %v225, 0.6931472
    %v227 = vmul.f32 -0.5, %v188
    %v228 = vadd.f32 %v227, 1.0
    %v229 = vmul.f32 %v228, %v188
    %v230 = vand.u32 2147483647, %v188
    %vm231 = vcmp.lt.f32.partialorder %v230, 0.0004427343
    %v232 = vsel %vm231, %v229, %v226
    %v233 = vadd.f32 %v190, 1.0
    %v234 = vlog2.pop %v233
    %v235 = vmul.f32 %v234, 0.6931472
    %v236 = vmul.f32 -0.5, %v190
    %v237 = vadd.f32 %v236, 1.0
    %v238 = vmul.f32 %v237, %v190
    %v239 = vand.u32 2147483647, %v190
    %vm240 = vcmp.lt.f32.partialorder %v239, 0.0004427343
    %v241 = vsel %vm240, %v238, %v235
    %v242 = vadd.f32 %v192, 1.0
    %v243 = vlog2.pop %v242
    %v244 = vmul.f32 %v243, 0.6931472
    %v245 = vmul.f32 -0.5, %v192
    %v246 = vadd.f32 %v245, 1.0
    %v247 = vmul.f32 %v246, %v192
    %v248 = vand.u32 2147483647, %v192
    %vm249 = vcmp.lt.f32.partialorder %v248, 0.0004427343
    %v250 = vsel %vm249, %v247, %v244
    %v251 = vadd.f32 %v194, 1.0
    %v252 = vlog2.pop %v251
    %v253 = vmul.f32 %v252, 0.6931472
    %v254 = vmul.f32 -0.5, %v194
    %v255 = vadd.f32 %v254, 1.0
    %v256 = vmul.f32 %v255, %v194
    %v257 = vand.u32 2147483647, %v194
    %vm258 = vcmp.lt.f32.partialorder %v257, 0.0004427343
    %v259 = vsel %vm258, %v256, %v253
    %v260 = vadd.f32 %v196, 1.0
    %v261 = vlog2.pop %v260
    %v262 = vmul.f32 %v261, 0.6931472
    %v263 = vmul.f32 -0.5, %v196
    %v264 = vadd.f32 %v263, 1.0
    %v265 = vmul.f32 %v264, %v196
    %v266 = vand.u32 2147483647, %v196
    %vm267 = vcmp.lt.f32.partialorder %v266, 0.0004427343
    %v268 = vsel %vm267, %v265, %v262
    %v269 = vadd.f32 %v133, %v205
    %v270 = vadd.f32 %v134, %v214
    %v271 = vadd.f32 %v135, %v223
    %v272 = vadd.f32 %v136, %v232
    %v273 = vadd.f32 %v137, %v241
    %v274 = vadd.f32 %v138, %v250
    %v275 = vadd.f32 %v139, %v259
    %v276 = vadd.f32 %v140, %v268
    %v277 = vsel %vm149, %v157, %v269
    %v278 = vsel %vm150, %v158, %v270
    %v279 = vsel %vm151, %v159, %v271
    %v280 = vsel %vm152, %v160, %v272
    %v281 = vsel %vm153, %v161, %v273
    %v282 = vsel %vm154, %v162, %v274
    %v283 = vsel %vm155, %v163, %v275
    %v284 = vsel %vm156, %v164, %v276
    %v285 = vpack.c.bf16 %v277, %v277
    %v286 = vpack.c.bf16 %v278, %v278
    %v287 = vpack.c.bf16 %v279, %v279
    %v288 = vpack.c.bf16 %v280, %v280
    %v289 = vpack.c.bf16 %v281, %v281
    %v290 = vpack.c.bf16 %v282, %v282
    %v291 = vpack.c.bf16 %v283, %v283
    %v292 = vpack.c.bf16 %v284, %v284
    %v293 = vld [vmem:[%s3] sm:$0xff]
    %v294 = vld [vmem:[%s3 + $0x8] sm:$0xff]
    %v295 = vld [vmem:[%s3 + $0x10] sm:$0xff]
    %v296 = vld [vmem:[%s3 + $0x18] sm:$0xf]
    %v297 = vld [vmem:[%s3 + $0x1c] sm:$0xff]
    %v298 = vld [vmem:[%s3 + $0x24] sm:$0xff]
    %v299 = vld [vmem:[%s3 + $0x2c] sm:$0xff]
    %v300 = vld [vmem:[%s3 + $0x34] sm:$0xf]
    %v301 = vld [vmem:[%s3 + $0x38] sm:$0xff]
    %v302 = vld [vmem:[%s3 + $0x40] sm:$0xff]
    %v303 = vld [vmem:[%s3 + $0x48] sm:$0xff]
    %v304 = vld [vmem:[%s3 + $0x50] sm:$0xf]
    %v305 = vld [vmem:[%s3 + $0x54] sm:$0xff]
    %v306 = vld [vmem:[%s3 + $0x5c] sm:$0xff]
    %v307 = vld [vmem:[%s3 + $0x64] sm:$0xff]
    %v308 = vld [vmem:[%s3 + $0x6c] sm:$0xf]
    %v309 = vld [vmem:[%s3 + $0x70] sm:$0xff]
    %v310 = vld [vmem:[%s3 + $0x78] sm:$0xff]
    %v311 = vld [vmem:[%s3 + $0x80] sm:$0xff]
    %v312 = vld [vmem:[%s3 + $0x88] sm:$0xf]
    %v313 = vld [vmem:[%s3 + $0x8c] sm:$0xff]
    %v314 = vld [vmem:[%s3 + $0x94] sm:$0xff]
    %v315 = vld [vmem:[%s3 + $0x9c] sm:$0xff]
    %v316 = vld [vmem:[%s3 + $0xa4] sm:$0xf]
    %v317 = vld [vmem:[%s3 + $0xa8] sm:$0xff]
    %v318 = vld [vmem:[%s3 + $0xb0] sm:$0xff]
    %v319 = vld [vmem:[%s3 + $0xb8] sm:$0xff]
    %v320 = vld [vmem:[%s3 + $0xc0] sm:$0xf]
    %v321 = vld [vmem:[%s3 + $0xc4] sm:$0xff]
    %v322 = vld [vmem:[%s3 + $0xcc] sm:$0xff]
    %v323 = vld [vmem:[%s3 + $0xd4] sm:$0xff]
    %v324 = vld [vmem:[%s3 + $0xdc] sm:$0xf]
    %v325 = vld [vmem:[%s3 + $0xe0] sm:$0xff]
    %v326 = vld [vmem:[%s3 + $0xe8] sm:$0xff]
    %v327 = vld [vmem:[%s3 + $0xf0] sm:$0xff]
    %v328 = vld [vmem:[%s3 + $0xf8] sm:$0xf]
    %v329 = vld [vmem:[%s3 + $0xfc] sm:$0xff]
    %v330 = vld [vmem:[%s3 + $0x104] sm:$0xff]
    %v331 = vld [vmem:[%s3 + $0x10c] sm:$0xff]
    %v332 = vld [vmem:[%s3 + $0x114] sm:$0xf]
    %v333 = vld [vmem:[%s3 + $0x118] sm:$0xff]
    %v334 = vld [vmem:[%s3 + $0x120] sm:$0xff]
    %v335 = vld [vmem:[%s3 + $0x128] sm:$0xff]
    %v336 = vld [vmem:[%s3 + $0x130] sm:$0xf]
    %v337 = vld [vmem:[%s3 + $0x134] sm:$0xff]
    %v338 = vld [vmem:[%s3 + $0x13c] sm:$0xff]
    %v339 = vld [vmem:[%s3 + $0x144] sm:$0xff]
    %v340 = vld [vmem:[%s3 + $0x14c] sm:$0xf]
    %v341 = vld [vmem:[%s3 + $0x150] sm:$0xff]
    %v342 = vld [vmem:[%s3 + $0x158] sm:$0xff]
    %v343 = vld [vmem:[%s3 + $0x160] sm:$0xff]
    %v344 = vld [vmem:[%s3 + $0x168] sm:$0xf]
    %v345 = vld [vmem:[%s3 + $0x16c] sm:$0xff]
    %v346 = vld [vmem:[%s3 + $0x174] sm:$0xff]
    %v347 = vld [vmem:[%s3 + $0x17c] sm:$0xff]
    %v348 = vld [vmem:[%s3 + $0x184] sm:$0xf]
    %v349 = vld [vmem:[%s3 + $0x188] sm:$0xff]
    %v350 = vld [vmem:[%s3 + $0x190] sm:$0xff]
    %v351 = vld [vmem:[%s3 + $0x198] sm:$0xff]
    %v352 = vld [vmem:[%s3 + $0x1a0] sm:$0xf]
    %v353 = vld [vmem:[%s3 + $0x1a4] sm:$0xff]
    %v354 = vld [vmem:[%s3 + $0x1ac] sm:$0xff]
    %v355 = vld [vmem:[%s3 + $0x1b4] sm:$0xff]
    %v356 = vld [vmem:[%s3 + $0x1bc] sm:$0xf]
    %v357 = vld [vmem:[%s3 + $0x1c0] sm:$0xff]
    %v358 = vld [vmem:[%s3 + $0x1c8] sm:$0xff]
    %v359 = vld [vmem:[%s3 + $0x1d0] sm:$0xff]
    %v360 = vld [vmem:[%s3 + $0x1d8] sm:$0xf]
    %v361 = vld [vmem:[%s3 + $0x1dc] sm:$0xff]
    %v362 = vld [vmem:[%s3 + $0x1e4] sm:$0xff]
    %v363 = vld [vmem:[%s3 + $0x1ec] sm:$0xff]
    %v364 = vld [vmem:[%s3 + $0x1f4] sm:$0xf]
    %v365 = vld [vmem:[%s3 + $0x1f8] sm:$0xff]
    %v366 = vld [vmem:[%s3 + $0x200] sm:$0xff]
    %v367 = vld [vmem:[%s3 + $0x208] sm:$0xff]
    %v368 = vld [vmem:[%s3 + $0x210] sm:$0xf]
    %v369 = vld [vmem:[%s3 + $0x214] sm:$0xff]
    %v370 = vld [vmem:[%s3 + $0x21c] sm:$0xff]
    %v371 = vld [vmem:[%s3 + $0x224] sm:$0xff]
    %v372 = vld [vmem:[%s3 + $0x22c] sm:$0xf]
    %v373 = vld [vmem:[%s3 + $0x230] sm:$0xff]
    %v374 = vld [vmem:[%s3 + $0x238] sm:$0xff]
    %v375 = vld [vmem:[%s3 + $0x240] sm:$0xff]
    %v376 = vld [vmem:[%s3 + $0x248] sm:$0xf]
    %v377 = vld [vmem:[%s3 + $0x24c] sm:$0xff]
    %v378 = vld [vmem:[%s3 + $0x254] sm:$0xff]
    %v379 = vld [vmem:[%s3 + $0x25c] sm:$0xff]
    %v380 = vld [vmem:[%s3 + $0x264] sm:$0xf]
    %v381 = vld [vmem:[%s3 + $0x268] sm:$0xff]
    %v382 = vld [vmem:[%s3 + $0x270] sm:$0xff]
    %v383 = vld [vmem:[%s3 + $0x278] sm:$0xff]
    %v384 = vld [vmem:[%s3 + $0x280] sm:$0xf]
    %v385 = vld [vmem:[%s3 + $0x284] sm:$0xff]
    %v386 = vld [vmem:[%s3 + $0x28c] sm:$0xff]
    %v387 = vld [vmem:[%s3 + $0x294] sm:$0xff]
    %v388 = vld [vmem:[%s3 + $0x29c] sm:$0xf]
    %v389 = vld [vmem:[%s3 + $0x2a0] sm:$0xff]
    %v390 = vld [vmem:[%s3 + $0x2a8] sm:$0xff]
    %v391 = vld [vmem:[%s3 + $0x2b0] sm:$0xff]
    %v392 = vld [vmem:[%s3 + $0x2b8] sm:$0xf]
    %v393 = vld [vmem:[%s3 + $0x2bc] sm:$0xff]
    %v394 = vld [vmem:[%s3 + $0x2c4] sm:$0xff]
    %v395 = vld [vmem:[%s3 + $0x2cc] sm:$0xff]
    %v396 = vld [vmem:[%s3 + $0x2d4] sm:$0xf]
    %v397 = vld [vmem:[%s3 + $0x2d8] sm:$0xff]
    %v398 = vld [vmem:[%s3 + $0x2e0] sm:$0xff]
    %v399 = vld [vmem:[%s3 + $0x2e8] sm:$0xff]
    %v400 = vld [vmem:[%s3 + $0x2f0] sm:$0xf]
    %v401 = vld [vmem:[%s3 + $0x2f4] sm:$0xff]
    %v402 = vld [vmem:[%s3 + $0x2fc] sm:$0xff]
    %v403 = vld [vmem:[%s3 + $0x304] sm:$0xff]
    %v404 = vld [vmem:[%s3 + $0x30c] sm:$0xf]
    %v405 = vld [vmem:[%s3 + $0x310] sm:$0xff]
    %v406 = vld [vmem:[%s3 + $0x318] sm:$0xff]
    %v407 = vld [vmem:[%s3 + $0x320] sm:$0xff]
    %v408 = vld [vmem:[%s3 + $0x328] sm:$0xf]
    %v409 = vld [vmem:[%s3 + $0x32c] sm:$0xff]
    %v410 = vld [vmem:[%s3 + $0x334] sm:$0xff]
    %v411 = vld [vmem:[%s3 + $0x33c] sm:$0xff]
    %v412 = vld [vmem:[%s3 + $0x344] sm:$0xf]
    %v413 = vld [vmem:[%s3 + $0x348] sm:$0xff]
    %v414 = vld [vmem:[%s3 + $0x350] sm:$0xff]
    %v415 = vld [vmem:[%s3 + $0x358] sm:$0xff]
    %v416 = vld [vmem:[%s3 + $0x360] sm:$0xf]
    %v417 = vld [vmem:[%s3 + $0x364] sm:$0xff]
    %v418 = vld [vmem:[%s3 + $0x36c] sm:$0xff]
    %v419 = vld [vmem:[%s3 + $0x374] sm:$0xff]
    %v420 = vld [vmem:[%s3 + $0x37c] sm:$0xf]
    %v421 = vld [vmem:[%s3 + $0x380] sm:$0xff]
    %v422 = vld [vmem:[%s3 + $0x388] sm:$0xff]
    %v423 = vld [vmem:[%s3 + $0x390] sm:$0xff]
    %v424 = vld [vmem:[%s3 + $0x398] sm:$0xf]
    %v425 = vld [vmem:[%s3 + $0x39c] sm:$0xff]
    %v426 = vld [vmem:[%s3 + $0x3a4] sm:$0xff]
    %v427 = vld [vmem:[%s3 + $0x3ac] sm:$0xff]
    %v428 = vld [vmem:[%s3 + $0x3b4] sm:$0xf]
    %v429 = vld [vmem:[%s3 + $0x3b8] sm:$0xff]
    %v430 = vld [vmem:[%s3 + $0x3c0] sm:$0xff]
    %v431 = vld [vmem:[%s3 + $0x3c8] sm:$0xff]
    %v432 = vld [vmem:[%s3 + $0x3d0] sm:$0xf]
    %v433 = vld [vmem:[%s3 + $0x3d4] sm:$0xff]
    %v434 = vld [vmem:[%s3 + $0x3dc] sm:$0xff]
    %v435 = vld [vmem:[%s3 + $0x3e4] sm:$0xff]
    %v436 = vld [vmem:[%s3 + $0x3ec] sm:$0xf]
    %v437 = vld [vmem:[%s3 + $0x3f0] sm:$0xff]
    %v438 = vld [vmem:[%s3 + $0x3f8] sm:$0xff]
    %v439 = vld [vmem:[%s3 + $0x400] sm:$0xff]
    %v440 = vld [vmem:[%s3 + $0x408] sm:$0xf]
    %v441 = vld [vmem:[%s3 + $0x40c] sm:$0xff]
    %v442 = vld [vmem:[%s3 + $0x414] sm:$0xff]
    %v443 = vld [vmem:[%s3 + $0x41c] sm:$0xff]
    %v444 = vld [vmem:[%s3 + $0x424] sm:$0xf]
    %v445 = vld [vmem:[%s3 + $0x428] sm:$0xff]
    %v446 = vld [vmem:[%s3 + $0x430] sm:$0xff]
    %v447 = vld [vmem:[%s3 + $0x438] sm:$0xff]
    %v448 = vld [vmem:[%s3 + $0x440] sm:$0xf]
    %v449 = vld [vmem:[%s3 + $0x444] sm:$0xff]
    %v450 = vld [vmem:[%s3 + $0x44c] sm:$0xff]
    %v451 = vld [vmem:[%s3 + $0x454] sm:$0xff]
    %v452 = vld [vmem:[%s3 + $0x45c] sm:$0xf]
    %v453 = vld [vmem:[%s3 + $0x460] sm:$0xff]
    %v454 = vld [vmem:[%s3 + $0x468] sm:$0xff]
    %v455 = vld [vmem:[%s3 + $0x470] sm:$0xff]
    %v456 = vld [vmem:[%s3 + $0x478] sm:$0xf]
    %v457 = vld [vmem:[%s3 + $0x47c] sm:$0xff]
    %v458 = vld [vmem:[%s3 + $0x484] sm:$0xff]
    %v459 = vld [vmem:[%s3 + $0x48c] sm:$0xff]
    %v460 = vld [vmem:[%s3 + $0x494] sm:$0xf]
    %v461 = vld [vmem:[%s3 + $0x498] sm:$0xff]
    %v462 = vld [vmem:[%s3 + $0x4a0] sm:$0xff]
    %v463 = vld [vmem:[%s3 + $0x4a8] sm:$0xff]
    %v464 = vld [vmem:[%s3 + $0x4b0] sm:$0xf]
    %v465 = vld [vmem:[%s3 + $0x4b4] sm:$0xff]
    %v466 = vld [vmem:[%s3 + $0x4bc] sm:$0xff]
    %v467 = vld [vmem:[%s3 + $0x4c4] sm:$0xff]
    %v468 = vld [vmem:[%s3 + $0x4cc] sm:$0xf]
    %v469 = vld [vmem:[%s3 + $0x4d0] sm:$0xff]
    %v470 = vld [vmem:[%s3 + $0x4d8] sm:$0xff]
    %v471 = vld [vmem:[%s3 + $0x4e0] sm:$0xff]
    %v472 = vld [vmem:[%s3 + $0x4e8] sm:$0xf]
    %v473 = vld [vmem:[%s3 + $0x4ec] sm:$0xff]
    %v474 = vld [vmem:[%s3 + $0x4f4] sm:$0xff]
    %v475 = vld [vmem:[%s3 + $0x4fc] sm:$0xff]
    %v476 = vld [vmem:[%s3 + $0x504] sm:$0xf]
    %v477 = vld [vmem:[%s3 + $0x508] sm:$0xff]
    %v478 = vld [vmem:[%s3 + $0x510] sm:$0xff]
    %v479 = vld [vmem:[%s3 + $0x518] sm:$0xff]
    %v480 = vld [vmem:[%s3 + $0x520] sm:$0xf]
    %v481 = vld [vmem:[%s3 + $0x524] sm:$0xff]
    %v482 = vld [vmem:[%s3 + $0x52c] sm:$0xff]
    %v483 = vld [vmem:[%s3 + $0x534] sm:$0xff]
    %v484 = vld [vmem:[%s3 + $0x53c] sm:$0xf]
    %v485 = vld [vmem:[%s3 + $0x540] sm:$0xff]
    %v486 = vld [vmem:[%s3 + $0x548] sm:$0xff]
    %v487 = vld [vmem:[%s3 + $0x550] sm:$0xff]
    %v488 = vld [vmem:[%s3 + $0x558] sm:$0xf]
    %v489 = vld [vmem:[%s3 + $0x55c] sm:$0xff]
    %v490 = vld [vmem:[%s3 + $0x564] sm:$0xff]
    %v491 = vld [vmem:[%s3 + $0x56c] sm:$0xff]
    %v492 = vld [vmem:[%s3 + $0x574] sm:$0xf]
    %v493 = vld [vmem:[%s3 + $0x578] sm:$0xff]
    %v494 = vld [vmem:[%s3 + $0x580] sm:$0xff]
    %v495 = vld [vmem:[%s3 + $0x588] sm:$0xff]
    %v496 = vld [vmem:[%s3 + $0x590] sm:$0xf]
    %v497 = vld [vmem:[%s3 + $0x594] sm:$0xff]
    %v498 = vld [vmem:[%s3 + $0x59c] sm:$0xff]
    %v499 = vld [vmem:[%s3 + $0x5a4] sm:$0xff]
    %v500 = vld [vmem:[%s3 + $0x5ac] sm:$0xf]
    %v501 = vld [vmem:[%s3 + $0x5b0] sm:$0xff]
    %v502 = vld [vmem:[%s3 + $0x5b8] sm:$0xff]
    %v503 = vld [vmem:[%s3 + $0x5c0] sm:$0xff]
    %v504 = vld [vmem:[%s3 + $0x5c8] sm:$0xf]
    %v505 = vld [vmem:[%s3 + $0x5cc] sm:$0xff]
    %v506 = vld [vmem:[%s3 + $0x5d4] sm:$0xff]
    %v507 = vld [vmem:[%s3 + $0x5dc] sm:$0xff]
    %v508 = vld [vmem:[%s3 + $0x5e4] sm:$0xf]
    %v509 = vld [vmem:[%s3 + $0x5e8] sm:$0xff]
    %v510 = vld [vmem:[%s3 + $0x5f0] sm:$0xff]
    %v511 = vld [vmem:[%s3 + $0x5f8] sm:$0xff]
    %v512 = vld [vmem:[%s3 + $0x600] sm:$0xf]
    %v513 = vld [vmem:[%s3 + $0x604] sm:$0xff]
    %v514 = vld [vmem:[%s3 + $0x60c] sm:$0xff]
    %v515 = vld [vmem:[%s3 + $0x614] sm:$0xff]
    %v516 = vld [vmem:[%s3 + $0x61c] sm:$0xf]
    %v517 = vld [vmem:[%s3 + $0x620] sm:$0xff]
    %v518 = vld [vmem:[%s3 + $0x628] sm:$0xff]
    %v519 = vld [vmem:[%s3 + $0x630] sm:$0xff]
    %v520 = vld [vmem:[%s3 + $0x638] sm:$0xf]
    %v521 = vld [vmem:[%s3 + $0x63c] sm:$0xff]
    %v522 = vld [vmem:[%s3 + $0x644] sm:$0xff]
    %v523 = vld [vmem:[%s3 + $0x64c] sm:$0xff]
    %v524 = vld [vmem:[%s3 + $0x654] sm:$0xf]
    %v525 = vld [vmem:[%s3 + $0x658] sm:$0xff]
    %v526 = vld [vmem:[%s3 + $0x660] sm:$0xff]
    %v527 = vld [vmem:[%s3 + $0x668] sm:$0xff]
    %v528 = vld [vmem:[%s3 + $0x670] sm:$0xf]
    %v529 = vld [vmem:[%s3 + $0x674] sm:$0xff]
    %v530 = vld [vmem:[%s3 + $0x67c] sm:$0xff]
    %v531 = vld [vmem:[%s3 + $0x684] sm:$0xff]
    %v532 = vld [vmem:[%s3 + $0x68c] sm:$0xf]
    %v533 = vld [vmem:[%s3 + $0x690] sm:$0xff]
    %v534 = vld [vmem:[%s3 + $0x698] sm:$0xff]
    %v535 = vld [vmem:[%s3 + $0x6a0] sm:$0xff]
    %v536 = vld [vmem:[%s3 + $0x6a8] sm:$0xf]
    %v537 = vld [vmem:[%s3 + $0x6ac] sm:$0xff]
    %v538 = vld [vmem:[%s3 + $0x6b4] sm:$0xff]
    %v539 = vld [vmem:[%s3 + $0x6bc] sm:$0xff]
    %v540 = vld [vmem:[%s3 + $0x6c4] sm:$0xf]
    %v541 = vld [vmem:[%s3 + $0x6c8] sm:$0xff]
    %v542 = vld [vmem:[%s3 + $0x6d0] sm:$0xff]
    %v543 = vld [vmem:[%s3 + $0x6d8] sm:$0xff]
    %v544 = vld [vmem:[%s3 + $0x6e0] sm:$0xf]
    %v545 = vld [vmem:[%s3 + $0x6e4] sm:$0xff]
    %v546 = vld [vmem:[%s3 + $0x6ec] sm:$0xff]
    %v547 = vld [vmem:[%s3 + $0x6f4] sm:$0xff]
    %v548 = vld [vmem:[%s3 + $0x6fc] sm:$0xf]
    %v549 = vld [vmem:[%s3 + $0x700] sm:$0xff]
    %v550 = vld [vmem:[%s3 + $0x708] sm:$0xff]
    %v551 = vld [vmem:[%s3 + $0x710] sm:$0xff]
    %v552 = vld [vmem:[%s3 + $0x718] sm:$0xf]
    %v553 = vld [vmem:[%s3 + $0x71c] sm:$0xff]
    %v554 = vld [vmem:[%s3 + $0x724] sm:$0xff]
    %v555 = vld [vmem:[%s3 + $0x72c] sm:$0xff]
    %v556 = vld [vmem:[%s3 + $0x734] sm:$0xf]
    %v557 = vld [vmem:[%s3 + $0x738] sm:$0xff]
    %v558 = vld [vmem:[%s3 + $0x740] sm:$0xff]
    %v559 = vld [vmem:[%s3 + $0x748] sm:$0xff]
    %v560 = vld [vmem:[%s3 + $0x750] sm:$0xf]
    %v561 = vld [vmem:[%s3 + $0x754] sm:$0xff]
    %v562 = vld [vmem:[%s3 + $0x75c] sm:$0xff]
    %v563 = vld [vmem:[%s3 + $0x764] sm:$0xff]
    %v564 = vld [vmem:[%s3 + $0x76c] sm:$0xf]
    %v565 = vld [vmem:[%s3 + $0x770] sm:$0xff]
    %v566 = vld [vmem:[%s3 + $0x778] sm:$0xff]
    %v567 = vld [vmem:[%s3 + $0x780] sm:$0xff]
    %v568 = vld [vmem:[%s3 + $0x788] sm:$0xf]
    %v569 = vld [vmem:[%s3 + $0x78c] sm:$0xff]
    %v570 = vld [vmem:[%s3 + $0x794] sm:$0xff]
    %v571 = vld [vmem:[%s3 + $0x79c] sm:$0xff]
    %v572 = vld [vmem:[%s3 + $0x7a4] sm:$0xf]
    %v573 = vld [vmem:[%s3 + $0x7a8] sm:$0xff]
    %v574 = vld [vmem:[%s3 + $0x7b0] sm:$0xff]
    %v575 = vld [vmem:[%s3 + $0x7b8] sm:$0xff]
    %v576 = vld [vmem:[%s3 + $0x7c0] sm:$0xf]
    %v577 = vld [vmem:[%s3 + $0x7c4] sm:$0xff]
    %v578 = vld [vmem:[%s3 + $0x7cc] sm:$0xff]
    %v579 = vld [vmem:[%s3 + $0x7d4] sm:$0xff]
    %v580 = vld [vmem:[%s3 + $0x7dc] sm:$0xf]
    %v581 = vld [vmem:[%s3 + $0x7e0] sm:$0xff]
    %v582 = vld [vmem:[%s3 + $0x7e8] sm:$0xff]
    %v583 = vld [vmem:[%s3 + $0x7f0] sm:$0xff]
    %v584 = vld [vmem:[%s3 + $0x7f8] sm:$0xf]
    %v585 = vld [vmem:[%s3 + $0x7fc] sm:$0xff]
    %v586 = vld [vmem:[%s3 + $0x804] sm:$0xff]
    %v587 = vld [vmem:[%s3 + $0x80c] sm:$0xff]
    %v588 = vld [vmem:[%s3 + $0x814] sm:$0xf]
    %v589 = vld [vmem:[%s3 + $0x818] sm:$0xff]
    %v590 = vld [vmem:[%s3 + $0x820] sm:$0xff]
    %v591 = vld [vmem:[%s3 + $0x828] sm:$0xff]
    %v592 = vld [vmem:[%s3 + $0x830] sm:$0xf]
    %v593 = vld [vmem:[%s3 + $0x834] sm:$0xff]
    %v594 = vld [vmem:[%s3 + $0x83c] sm:$0xff]
    %v595 = vld [vmem:[%s3 + $0x844] sm:$0xff]
    %v596 = vld [vmem:[%s3 + $0x84c] sm:$0xf]
    %v597 = vld [vmem:[%s3 + $0x850] sm:$0xff]
    %v598 = vld [vmem:[%s3 + $0x858] sm:$0xff]
    %v599 = vld [vmem:[%s3 + $0x860] sm:$0xff]
    %v600 = vld [vmem:[%s3 + $0x868] sm:$0xf]
    %v601 = vld [vmem:[%s3 + $0x86c] sm:$0xff]
    %v602 = vld [vmem:[%s3 + $0x874] sm:$0xff]
    %v603 = vld [vmem:[%s3 + $0x87c] sm:$0xff]
    %v604 = vld [vmem:[%s3 + $0x884] sm:$0xf]
    %v605 = vld [vmem:[%s3 + $0x888] sm:$0xff]
    %v606 = vld [vmem:[%s3 + $0x890] sm:$0xff]
    %v607 = vld [vmem:[%s3 + $0x898] sm:$0xff]
    %v608 = vld [vmem:[%s3 + $0x8a0] sm:$0xf]
    %v609 = vld [vmem:[%s3 + $0x8a4] sm:$0xff]
    %v610 = vld [vmem:[%s3 + $0x8ac] sm:$0xff]
    %v611 = vld [vmem:[%s3 + $0x8b4] sm:$0xff]
    %v612 = vld [vmem:[%s3 + $0x8bc] sm:$0xf]
    %v613 = vld [vmem:[%s3 + $0x8c0] sm:$0xff]
    %v614 = vld [vmem:[%s3 + $0x8c8] sm:$0xff]
    %v615 = vld [vmem:[%s3 + $0x8d0] sm:$0xff]
    %v616 = vld [vmem:[%s3 + $0x8d8] sm:$0xf]
    %v617 = vld [vmem:[%s3 + $0x8dc] sm:$0xff]
    %v618 = vld [vmem:[%s3 + $0x8e4] sm:$0xff]
    %v619 = vld [vmem:[%s3 + $0x8ec] sm:$0xff]
    %v620 = vld [vmem:[%s3 + $0x8f4] sm:$0xf]
    %v621 = vld [vmem:[%s3 + $0x8f8] sm:$0xff]
    %v622 = vld [vmem:[%s3 + $0x900] sm:$0xff]
    %v623 = vld [vmem:[%s3 + $0x908] sm:$0xff]
    %v624 = vld [vmem:[%s3 + $0x910] sm:$0xf]
    %v625 = vld [vmem:[%s3 + $0x914] sm:$0xff]
    %v626 = vld [vmem:[%s3 + $0x91c] sm:$0xff]
    %v627 = vld [vmem:[%s3 + $0x924] sm:$0xff]
    %v628 = vld [vmem:[%s3 + $0x92c] sm:$0xf]
    %v629 = vld [vmem:[%s3 + $0x930] sm:$0xff]
    %v630 = vld [vmem:[%s3 + $0x938] sm:$0xff]
    %v631 = vld [vmem:[%s3 + $0x940] sm:$0xff]
    %v632 = vld [vmem:[%s3 + $0x948] sm:$0xf]
    %v633 = vld [vmem:[%s3 + $0x94c] sm:$0xff]
    %v634 = vld [vmem:[%s3 + $0x954] sm:$0xff]
    %v635 = vld [vmem:[%s3 + $0x95c] sm:$0xff]
    %v636 = vld [vmem:[%s3 + $0x964] sm:$0xf]
    %v637 = vld [vmem:[%s3 + $0x968] sm:$0xff]
    %v638 = vld [vmem:[%s3 + $0x970] sm:$0xff]
    %v639 = vld [vmem:[%s3 + $0x978] sm:$0xff]
    %v640 = vld [vmem:[%s3 + $0x980] sm:$0xf]
    %v641 = vld [vmem:[%s3 + $0x984] sm:$0xff]
    %v642 = vld [vmem:[%s3 + $0x98c] sm:$0xff]
    %v643 = vld [vmem:[%s3 + $0x994] sm:$0xff]
    %v644 = vld [vmem:[%s3 + $0x99c] sm:$0xf]
    %v645 = vld [vmem:[%s3 + $0x9a0] sm:$0xff]
    %v646 = vld [vmem:[%s3 + $0x9a8] sm:$0xff]
    %v647 = vld [vmem:[%s3 + $0x9b0] sm:$0xff]
    %v648 = vld [vmem:[%s3 + $0x9b8] sm:$0xf]
    %v649 = vld [vmem:[%s3 + $0x9bc] sm:$0xff]
    %v650 = vld [vmem:[%s3 + $0x9c4] sm:$0xff]
    %v651 = vld [vmem:[%s3 + $0x9cc] sm:$0xff]
    %v652 = vld [vmem:[%s3 + $0x9d4] sm:$0xf]
    %v653 = vld [vmem:[%s3 + $0x9d8] sm:$0xff]
    %v654 = vld [vmem:[%s3 + $0x9e0] sm:$0xff]
    %v655 = vld [vmem:[%s3 + $0x9e8] sm:$0xff]
    %v656 = vld [vmem:[%s3 + $0x9f0] sm:$0xf]
    %v657 = vld [vmem:[%s3 + $0x9f4] sm:$0xff]
    %v658 = vld [vmem:[%s3 + $0x9fc] sm:$0xff]
    %v659 = vld [vmem:[%s3 + $0xa04] sm:$0xff]
    %v660 = vld [vmem:[%s3 + $0xa0c] sm:$0xf]
    %v661 = vld [vmem:[%s3 + $0xa10] sm:$0xff]
    %v662 = vld [vmem:[%s3 + $0xa18] sm:$0xff]
    %v663 = vld [vmem:[%s3 + $0xa20] sm:$0xff]
    %v664 = vld [vmem:[%s3 + $0xa28] sm:$0xf]
    %v665 = vld [vmem:[%s3 + $0xa2c] sm:$0xff]
    %v666 = vld [vmem:[%s3 + $0xa34] sm:$0xff]
    %v667 = vld [vmem:[%s3 + $0xa3c] sm:$0xff]
    %v668 = vld [vmem:[%s3 + $0xa44] sm:$0xf]
    %v669 = vld [vmem:[%s3 + $0xa48] sm:$0xff]
    %v670 = vld [vmem:[%s3 + $0xa50] sm:$0xff]
    %v671 = vld [vmem:[%s3 + $0xa58] sm:$0xff]
    %v672 = vld [vmem:[%s3 + $0xa60] sm:$0xf]
    %v673 = vld [vmem:[%s3 + $0xa64] sm:$0xff]
    %v674 = vld [vmem:[%s3 + $0xa6c] sm:$0xff]
    %v675 = vld [vmem:[%s3 + $0xa74] sm:$0xff]
    %v676 = vld [vmem:[%s3 + $0xa7c] sm:$0xf]
    %v677 = vld [vmem:[%s3 + $0xa80] sm:$0xff]
    %v678 = vld [vmem:[%s3 + $0xa88] sm:$0xff]
    %v679 = vld [vmem:[%s3 + $0xa90] sm:$0xff]
    %v680 = vld [vmem:[%s3 + $0xa98] sm:$0xf]
    %v681 = vld [vmem:[%s3 + $0xa9c] sm:$0xff]
    %v682 = vld [vmem:[%s3 + $0xaa4] sm:$0xff]
    %v683 = vld [vmem:[%s3 + $0xaac] sm:$0xff]
    %v684 = vld [vmem:[%s3 + $0xab4] sm:$0xf]
    %v685 = vld [vmem:[%s3 + $0xab8] sm:$0xff]
    %v686 = vld [vmem:[%s3 + $0xac0] sm:$0xff]
    %v687 = vld [vmem:[%s3 + $0xac8] sm:$0xff]
    %v688 = vld [vmem:[%s3 + $0xad0] sm:$0xf]
    %v689 = vld [vmem:[%s3 + $0xad4] sm:$0xff]
    %v690 = vld [vmem:[%s3 + $0xadc] sm:$0xff]
    %v691 = vld [vmem:[%s3 + $0xae4] sm:$0xff]
    %v692 = vld [vmem:[%s3 + $0xaec] sm:$0xf]
    %v693 = vld [vmem:[%s3 + $0xaf0] sm:$0xff]
    %v694 = vld [vmem:[%s3 + $0xaf8] sm:$0xff]
    %v695 = vld [vmem:[%s3 + $0xb00] sm:$0xff]
    %v696 = vld [vmem:[%s3 + $0xb08] sm:$0xf]
    %v697 = vld [vmem:[%s3 + $0xb0c] sm:$0xff]
    %v698 = vld [vmem:[%s3 + $0xb14] sm:$0xff]
    %v699 = vld [vmem:[%s3 + $0xb1c] sm:$0xff]
    %v700 = vld [vmem:[%s3 + $0xb24] sm:$0xf]
    %v701 = vld [vmem:[%s3 + $0xb28] sm:$0xff]
    %v702 = vld [vmem:[%s3 + $0xb30] sm:$0xff]
    %v703 = vld [vmem:[%s3 + $0xb38] sm:$0xff]
    %v704 = vld [vmem:[%s3 + $0xb40] sm:$0xf]
    %v705 = vld [vmem:[%s3 + $0xb44] sm:$0xff]
    %v706 = vld [vmem:[%s3 + $0xb4c] sm:$0xff]
    %v707 = vld [vmem:[%s3 + $0xb54] sm:$0xff]
    %v708 = vld [vmem:[%s3 + $0xb5c] sm:$0xf]
    %v709 = vld [vmem:[%s3 + $0xb60] sm:$0xff]
    %v710 = vld [vmem:[%s3 + $0xb68] sm:$0xff]
    %v711 = vld [vmem:[%s3 + $0xb70] sm:$0xff]
    %v712 = vld [vmem:[%s3 + $0xb78] sm:$0xf]
    %v713 = vld [vmem:[%s3 + $0xb7c] sm:$0xff]
    %v714 = vld [vmem:[%s3 + $0xb84] sm:$0xff]
    %v715 = vld [vmem:[%s3 + $0xb8c] sm:$0xff]
    %v716 = vld [vmem:[%s3 + $0xb94] sm:$0xf]
    %v717 = vld [vmem:[%s3 + $0xb98] sm:$0xff]
    %v718 = vld [vmem:[%s3 + $0xba0] sm:$0xff]
    %v719 = vld [vmem:[%s3 + $0xba8] sm:$0xff]
    %v720 = vld [vmem:[%s3 + $0xbb0] sm:$0xf]
    %v721 = vld [vmem:[%s3 + $0xbb4] sm:$0xff]
    %v722 = vld [vmem:[%s3 + $0xbbc] sm:$0xff]
    %v723 = vld [vmem:[%s3 + $0xbc4] sm:$0xff]
    %v724 = vld [vmem:[%s3 + $0xbcc] sm:$0xf]
    %v725 = vld [vmem:[%s3 + $0xbd0] sm:$0xff]
    %v726 = vld [vmem:[%s3 + $0xbd8] sm:$0xff]
    %v727 = vld [vmem:[%s3 + $0xbe0] sm:$0xff]
    %v728 = vld [vmem:[%s3 + $0xbe8] sm:$0xf]
    %v729 = vld [vmem:[%s3 + $0xbec] sm:$0xff]
    %v730 = vld [vmem:[%s3 + $0xbf4] sm:$0xff]
    %v731 = vld [vmem:[%s3 + $0xbfc] sm:$0xff]
    %v732 = vld [vmem:[%s3 + $0xc04] sm:$0xf]
    %v733 = vld [vmem:[%s3 + $0xc08] sm:$0xff]
    %v734 = vld [vmem:[%s3 + $0xc10] sm:$0xff]
    %v735 = vld [vmem:[%s3 + $0xc18] sm:$0xff]
    %v736 = vld [vmem:[%s3 + $0xc20] sm:$0xf]
    %v737 = vld [vmem:[%s3 + $0xc24] sm:$0xff]
    %v738 = vld [vmem:[%s3 + $0xc2c] sm:$0xff]
    %v739 = vld [vmem:[%s3 + $0xc34] sm:$0xff]
    %v740 = vld [vmem:[%s3 + $0xc3c] sm:$0xf]
    %v741 = vld [vmem:[%s3 + $0xc40] sm:$0xff]
    %v742 = vld [vmem:[%s3 + $0xc48] sm:$0xff]
    %v743 = vld [vmem:[%s3 + $0xc50] sm:$0xff]
    %v744 = vld [vmem:[%s3 + $0xc58] sm:$0xf]
    %v745 = vld [vmem:[%s3 + $0xc5c] sm:$0xff]
    %v746 = vld [vmem:[%s3 + $0xc64] sm:$0xff]
    %v747 = vld [vmem:[%s3 + $0xc6c] sm:$0xff]
    %v748 = vld [vmem:[%s3 + $0xc74] sm:$0xf]
    %v749 = vld [vmem:[%s3 + $0xc78] sm:$0xff]
    %v750 = vld [vmem:[%s3 + $0xc80] sm:$0xff]
    %v751 = vld [vmem:[%s3 + $0xc88] sm:$0xff]
    %v752 = vld [vmem:[%s3 + $0xc90] sm:$0xf]
    %v753 = vld [vmem:[%s3 + $0xc94] sm:$0xff]
    %v754 = vld [vmem:[%s3 + $0xc9c] sm:$0xff]
    %v755 = vld [vmem:[%s3 + $0xca4] sm:$0xff]
    %v756 = vld [vmem:[%s3 + $0xcac] sm:$0xf]
    %v757 = vld [vmem:[%s3 + $0xcb0] sm:$0xff]
    %v758 = vld [vmem:[%s3 + $0xcb8] sm:$0xff]
    %v759 = vld [vmem:[%s3 + $0xcc0] sm:$0xff]
    %v760 = vld [vmem:[%s3 + $0xcc8] sm:$0xf]
    %v761 = vld [vmem:[%s3 + $0xccc] sm:$0xff]
    %v762 = vld [vmem:[%s3 + $0xcd4] sm:$0xff]
    %v763 = vld [vmem:[%s3 + $0xcdc] sm:$0xff]
    %v764 = vld [vmem:[%s3 + $0xce4] sm:$0xf]
    %v765 = vld [vmem:[%s3 + $0xce8] sm:$0xff]
    %v766 = vld [vmem:[%s3 + $0xcf0] sm:$0xff]
    %v767 = vld [vmem:[%s3 + $0xcf8] sm:$0xff]
    %v768 = vld [vmem:[%s3 + $0xd00] sm:$0xf]
    %v769 = vld [vmem:[%s3 + $0xd04] sm:$0xff]
    %v770 = vld [vmem:[%s3 + $0xd0c] sm:$0xff]
    %v771 = vld [vmem:[%s3 + $0xd14] sm:$0xff]
    %v772 = vld [vmem:[%s3 + $0xd1c] sm:$0xf]
    %v773 = vld [vmem:[%s3 + $0xd20] sm:$0xff]
    %v774 = vld [vmem:[%s3 + $0xd28] sm:$0xff]
    %v775 = vld [vmem:[%s3 + $0xd30] sm:$0xff]
    %v776 = vld [vmem:[%s3 + $0xd38] sm:$0xf]
    %v777 = vld [vmem:[%s3 + $0xd3c] sm:$0xff]
    %v778 = vld [vmem:[%s3 + $0xd44] sm:$0xff]
    %v779 = vld [vmem:[%s3 + $0xd4c] sm:$0xff]
    %v780 = vld [vmem:[%s3 + $0xd54] sm:$0xf]
    %v781 = vld [vmem:[%s3 + $0xd58] sm:$0xff]
    %v782 = vld [vmem:[%s3 + $0xd60] sm:$0xff]
    %v783 = vld [vmem:[%s3 + $0xd68] sm:$0xff]
    %v784 = vld [vmem:[%s3 + $0xd70] sm:$0xf]
    %v785 = vld [vmem:[%s3 + $0xd74] sm:$0xff]
    %v786 = vld [vmem:[%s3 + $0xd7c] sm:$0xff]
    %v787 = vld [vmem:[%s3 + $0xd84] sm:$0xff]
    %v788 = vld [vmem:[%s3 + $0xd8c] sm:$0xf]
    %v789 = vld [vmem:[%s3 + $0xd90] sm:$0xff]
    %v790 = vld [vmem:[%s3 + $0xd98] sm:$0xff]
    %v791 = vld [vmem:[%s3 + $0xda0] sm:$0xff]
    %v792 = vld [vmem:[%s3 + $0xda8] sm:$0xf]
    %v793 = vld [vmem:[%s3 + $0xdac] sm:$0xff]
    %v794 = vld [vmem:[%s3 + $0xdb4] sm:$0xff]
    %v795 = vld [vmem:[%s3 + $0xdbc] sm:$0xff]
    %v796 = vld [vmem:[%s3 + $0xdc4] sm:$0xf]
    %v797 = vld [vmem:[%s3 + $0xdc8] sm:$0xff]
    %v798 = vld [vmem:[%s3 + $0xdd0] sm:$0xff]
    %v799 = vld [vmem:[%s3 + $0xdd8] sm:$0xff]
    %v800 = vld [vmem:[%s3 + $0xde0] sm:$0xf]
    %v801 = vld [vmem:[%s3 + $0xde4] sm:$0xff]
    %v802 = vld [vmem:[%s3 + $0xdec] sm:$0xff]
    %v803 = vld [vmem:[%s3 + $0xdf4] sm:$0xff]
    %v804 = vld [vmem:[%s3 + $0xdfc] sm:$0xf]
    %v805 = vld [vmem:[%s4] sm:$0x7f]
    %v807 = vperm.slane %v805, 0
    %v808 = vperm.slane %v805, 1
    %v809 = vperm.slane %v805, 2
    %v810 = vperm.slane %v805, 3
    %v811 = vperm.slane %v805, 4
    %v812 = vperm.slane %v805, 5
    %v813 = vperm.slane %v805, 6
    %v1333 = vunpack.c.l.b16 %v293
    %v1334 = vunpack.c.h.b16 %v293
    %v1335 = vunpack.c.l.b16 %v294
    %v1336 = vunpack.c.h.b16 %v294
    %v1337 = vunpack.c.l.b16 %v295
    %v1338 = vunpack.c.h.b16 %v295
    %v1339 = vunpack.c.l.b16 %v296
    %v1340 = vunpack.c.l.b16 %v297
    %v1341 = vunpack.c.h.b16 %v297
    %v1342 = vunpack.c.l.b16 %v298
    %v1343 = vunpack.c.h.b16 %v298
    %v1344 = vunpack.c.l.b16 %v299
    %v1345 = vunpack.c.h.b16 %v299
    %v1346 = vunpack.c.l.b16 %v300
    %v1347 = vunpack.c.l.b16 %v301
    %v1348 = vunpack.c.h.b16 %v301
    %v1349 = vunpack.c.l.b16 %v302
    %v1350 = vunpack.c.h.b16 %v302
    %v1351 = vunpack.c.l.b16 %v303
    %v1352 = vunpack.c.h.b16 %v303
    %v1353 = vunpack.c.l.b16 %v304
    %v1354 = vunpack.c.l.b16 %v305
    %v1355 = vunpack.c.h.b16 %v305
    %v1356 = vunpack.c.l.b16 %v306
    %v1357 = vunpack.c.h.b16 %v306
    %v1358 = vunpack.c.l.b16 %v307
    %v1359 = vunpack.c.h.b16 %v307
    %v1360 = vunpack.c.l.b16 %v308
    %v1361 = vunpack.c.l.b16 %v309
    %v1362 = vunpack.c.h.b16 %v309
    %v1363 = vunpack.c.l.b16 %v310
    %v1364 = vunpack.c.h.b16 %v310
    %v1365 = vunpack.c.l.b16 %v311
    %v1366 = vunpack.c.h.b16 %v311
    %v1367 = vunpack.c.l.b16 %v312
    %v1368 = vunpack.c.l.b16 %v313
    %v1369 = vunpack.c.h.b16 %v313
    %v1370 = vunpack.c.l.b16 %v314
    %v1371 = vunpack.c.h.b16 %v314
    %v1372 = vunpack.c.l.b16 %v315
    %v1373 = vunpack.c.h.b16 %v315
    %v1374 = vunpack.c.l.b16 %v316
    %v1375 = vunpack.c.l.b16 %v317
    %v1376 = vunpack.c.h.b16 %v317
    %v1377 = vunpack.c.l.b16 %v318
    %v1378 = vunpack.c.h.b16 %v318
    %v1379 = vunpack.c.l.b16 %v319
    %v1380 = vunpack.c.h.b16 %v319
    %v1381 = vunpack.c.l.b16 %v320
    %v1382 = vunpack.c.l.b16 %v321
    %v1383 = vunpack.c.h.b16 %v321
    %v1384 = vunpack.c.l.b16 %v322
    %v1385 = vunpack.c.h.b16 %v322
    %v1386 = vunpack.c.l.b16 %v323
    %v1387 = vunpack.c.h.b16 %v323
    %v1388 = vunpack.c.l.b16 %v324
    %v1389 = vunpack.c.l.b16 %v325
    %v1390 = vunpack.c.h.b16 %v325
    %v1391 = vunpack.c.l.b16 %v326
    %v1392 = vunpack.c.h.b16 %v326
    %v1393 = vunpack.c.l.b16 %v327
    %v1394 = vunpack.c.h.b16 %v327
    %v1395 = vunpack.c.l.b16 %v328
    %v1396 = vunpack.c.l.b16 %v329
    %v1397 = vunpack.c.h.b16 %v329
    %v1398 = vunpack.c.l.b16 %v330
    %v1399 = vunpack.c.h.b16 %v330
    %v1400 = vunpack.c.l.b16 %v331
    %v1401 = vunpack.c.h.b16 %v331
    %v1402 = vunpack.c.l.b16 %v332
    %v1403 = vunpack.c.l.b16 %v333
    %v1404 = vunpack.c.h.b16 %v333
    %v1405 = vunpack.c.l.b16 %v334
    %v1406 = vunpack.c.h.b16 %v334
    %v1407 = vunpack.c.l.b16 %v335
    %v1408 = vunpack.c.h.b16 %v335
    %v1409 = vunpack.c.l.b16 %v336
    %v1410 = vunpack.c.l.b16 %v337
    %v1411 = vunpack.c.h.b16 %v337
    %v1412 = vunpack.c.l.b16 %v338
    %v1413 = vunpack.c.h.b16 %v338
    %v1414 = vunpack.c.l.b16 %v339
    %v1415 = vunpack.c.h.b16 %v339
    %v1416 = vunpack.c.l.b16 %v340
    %v1417 = vunpack.c.l.b16 %v341
    %v1418 = vunpack.c.h.b16 %v341
    %v1419 = vunpack.c.l.b16 %v342
    %v1420 = vunpack.c.h.b16 %v342
    %v1421 = vunpack.c.l.b16 %v343
    %v1422 = vunpack.c.h.b16 %v343
    %v1423 = vunpack.c.l.b16 %v344
    %v1424 = vunpack.c.l.b16 %v345
    %v1425 = vunpack.c.h.b16 %v345
    %v1426 = vunpack.c.l.b16 %v346
    %v1427 = vunpack.c.h.b16 %v346
    %v1428 = vunpack.c.l.b16 %v347
    %v1429 = vunpack.c.h.b16 %v347
    %v1430 = vunpack.c.l.b16 %v348
    %v1431 = vunpack.c.l.b16 %v349
    %v1432 = vunpack.c.h.b16 %v349
    %v1433 = vunpack.c.l.b16 %v350
    %v1434 = vunpack.c.h.b16 %v350
    %v1435 = vunpack.c.l.b16 %v351
    %v1436 = vunpack.c.h.b16 %v351
    %v1437 = vunpack.c.l.b16 %v352
    %v1438 = vunpack.c.l.b16 %v353
    %v1439 = vunpack.c.h.b16 %v353
    %v1440 = vunpack.c.l.b16 %v354
    %v1441 = vunpack.c.h.b16 %v354
    %v1442 = vunpack.c.l.b16 %v355
    %v1443 = vunpack.c.h.b16 %v355
    %v1444 = vunpack.c.l.b16 %v356
    %v1445 = vunpack.c.l.b16 %v357
    %v1446 = vunpack.c.h.b16 %v357
    %v1447 = vunpack.c.l.b16 %v358
    %v1448 = vunpack.c.h.b16 %v358
    %v1449 = vunpack.c.l.b16 %v359
    %v1450 = vunpack.c.h.b16 %v359
    %v1451 = vunpack.c.l.b16 %v360
    %v1452 = vunpack.c.l.b16 %v361
    %v1453 = vunpack.c.h.b16 %v361
    %v1454 = vunpack.c.l.b16 %v362
    %v1455 = vunpack.c.h.b16 %v362
    %v1456 = vunpack.c.l.b16 %v363
    %v1457 = vunpack.c.h.b16 %v363
    %v1458 = vunpack.c.l.b16 %v364
    %v1459 = vunpack.c.l.b16 %v365
    %v1460 = vunpack.c.h.b16 %v365
    %v1461 = vunpack.c.l.b16 %v366
    %v1462 = vunpack.c.h.b16 %v366
    %v1463 = vunpack.c.l.b16 %v367
    %v1464 = vunpack.c.h.b16 %v367
    %v1465 = vunpack.c.l.b16 %v368
    %v1466 = vunpack.c.l.b16 %v369
    %v1467 = vunpack.c.h.b16 %v369
    %v1468 = vunpack.c.l.b16 %v370
    %v1469 = vunpack.c.h.b16 %v370
    %v1470 = vunpack.c.l.b16 %v371
    %v1471 = vunpack.c.h.b16 %v371
    %v1472 = vunpack.c.l.b16 %v372
    %v1473 = vunpack.c.l.b16 %v373
    %v1474 = vunpack.c.h.b16 %v373
    %v1475 = vunpack.c.l.b16 %v374
    %v1476 = vunpack.c.h.b16 %v374
    %v1477 = vunpack.c.l.b16 %v375
    %v1478 = vunpack.c.h.b16 %v375
    %v1479 = vunpack.c.l.b16 %v376
    %v1480 = vunpack.c.l.b16 %v377
    %v1481 = vunpack.c.h.b16 %v377
    %v1482 = vunpack.c.l.b16 %v378
    %v1483 = vunpack.c.h.b16 %v378
    %v1484 = vunpack.c.l.b16 %v379
    %v1485 = vunpack.c.h.b16 %v379
    %v1486 = vunpack.c.l.b16 %v380
    %v1487 = vunpack.c.l.b16 %v381
    %v1488 = vunpack.c.h.b16 %v381
    %v1489 = vunpack.c.l.b16 %v382
    %v1490 = vunpack.c.h.b16 %v382
    %v1491 = vunpack.c.l.b16 %v383
    %v1492 = vunpack.c.h.b16 %v383
    %v1493 = vunpack.c.l.b16 %v384
    %v1494 = vunpack.c.l.b16 %v385
    %v1495 = vunpack.c.h.b16 %v385
    %v1496 = vunpack.c.l.b16 %v386
    %v1497 = vunpack.c.h.b16 %v386
    %v1498 = vunpack.c.l.b16 %v387
    %v1499 = vunpack.c.h.b16 %v387
    %v1500 = vunpack.c.l.b16 %v388
    %v1501 = vunpack.c.l.b16 %v389
    %v1502 = vunpack.c.h.b16 %v389
    %v1503 = vunpack.c.l.b16 %v390
    %v1504 = vunpack.c.h.b16 %v390
    %v1505 = vunpack.c.l.b16 %v391
    %v1506 = vunpack.c.h.b16 %v391
    %v1507 = vunpack.c.l.b16 %v392
    %v1508 = vunpack.c.l.b16 %v393
    %v1509 = vunpack.c.h.b16 %v393
    %v1510 = vunpack.c.l.b16 %v394
    %v1511 = vunpack.c.h.b16 %v394
    %v1512 = vunpack.c.l.b16 %v395
    %v1513 = vunpack.c.h.b16 %v395
    %v1514 = vunpack.c.l.b16 %v396
    %v1515 = vunpack.c.l.b16 %v397
    %v1516 = vunpack.c.h.b16 %v397
    %v1517 = vunpack.c.l.b16 %v398
    %v1518 = vunpack.c.h.b16 %v398
    %v1519 = vunpack.c.l.b16 %v399
    %v1520 = vunpack.c.h.b16 %v399
    %v1521 = vunpack.c.l.b16 %v400
    %v1522 = vunpack.c.l.b16 %v401
    %v1523 = vunpack.c.h.b16 %v401
    %v1524 = vunpack.c.l.b16 %v402
    %v1525 = vunpack.c.h.b16 %v402
    %v1526 = vunpack.c.l.b16 %v403
    %v1527 = vunpack.c.h.b16 %v403
    %v1528 = vunpack.c.l.b16 %v404
    %v1529 = vunpack.c.l.b16 %v405
    %v1530 = vunpack.c.h.b16 %v405
    %v1531 = vunpack.c.l.b16 %v406
    %v1532 = vunpack.c.h.b16 %v406
    %v1533 = vunpack.c.l.b16 %v407
    %v1534 = vunpack.c.h.b16 %v407
    %v1535 = vunpack.c.l.b16 %v408
    %v1536 = vunpack.c.l.b16 %v409
    %v1537 = vunpack.c.h.b16 %v409
    %v1538 = vunpack.c.l.b16 %v410
    %v1539 = vunpack.c.h.b16 %v410
    %v1540 = vunpack.c.l.b16 %v411
    %v1541 = vunpack.c.h.b16 %v411
    %v1542 = vunpack.c.l.b16 %v412
    %v1543 = vunpack.c.l.b16 %v413
    %v1544 = vunpack.c.h.b16 %v413
    %v1545 = vunpack.c.l.b16 %v414
    %v1546 = vunpack.c.h.b16 %v414
    %v1547 = vunpack.c.l.b16 %v415
    %v1548 = vunpack.c.h.b16 %v415
    %v1549 = vunpack.c.l.b16 %v416
    %v1550 = vunpack.c.l.b16 %v417
    %v1551 = vunpack.c.h.b16 %v417
    %v1552 = vunpack.c.l.b16 %v418
    %v1553 = vunpack.c.h.b16 %v418
    %v1554 = vunpack.c.l.b16 %v419
    %v1555 = vunpack.c.h.b16 %v419
    %v1556 = vunpack.c.l.b16 %v420
    %v1557 = vunpack.c.l.b16 %v421
    %v1558 = vunpack.c.h.b16 %v421
    %v1559 = vunpack.c.l.b16 %v422
    %v1560 = vunpack.c.h.b16 %v422
    %v1561 = vunpack.c.l.b16 %v423
    %v1562 = vunpack.c.h.b16 %v423
    %v1563 = vunpack.c.l.b16 %v424
    %v1564 = vunpack.c.l.b16 %v425
    %v1565 = vunpack.c.h.b16 %v425
    %v1566 = vunpack.c.l.b16 %v426
    %v1567 = vunpack.c.h.b16 %v426
    %v1568 = vunpack.c.l.b16 %v427
    %v1569 = vunpack.c.h.b16 %v427
    %v1570 = vunpack.c.l.b16 %v428
    %v1571 = vunpack.c.l.b16 %v429
    %v1572 = vunpack.c.h.b16 %v429
    %v1573 = vunpack.c.l.b16 %v430
    %v1574 = vunpack.c.h.b16 %v430
    %v1575 = vunpack.c.l.b16 %v431
    %v1576 = vunpack.c.h.b16 %v431
    %v1577 = vunpack.c.l.b16 %v432
    %v1578 = vunpack.c.l.b16 %v433
    %v1579 = vunpack.c.h.b16 %v433
    %v1580 = vunpack.c.l.b16 %v434
    %v1581 = vunpack.c.h.b16 %v434
    %v1582 = vunpack.c.l.b16 %v435
    %v1583 = vunpack.c.h.b16 %v435
    %v1584 = vunpack.c.l.b16 %v436
    %v1585 = vunpack.c.l.b16 %v437
    %v1586 = vunpack.c.h.b16 %v437
    %v1587 = vunpack.c.l.b16 %v438
    %v1588 = vunpack.c.h.b16 %v438
    %v1589 = vunpack.c.l.b16 %v439
    %v1590 = vunpack.c.h.b16 %v439
    %v1591 = vunpack.c.l.b16 %v440
    %v1592 = vunpack.c.l.b16 %v441
    %v1593 = vunpack.c.h.b16 %v441
    %v1594 = vunpack.c.l.b16 %v442
    %v1595 = vunpack.c.h.b16 %v442
    %v1596 = vunpack.c.l.b16 %v443
    %v1597 = vunpack.c.h.b16 %v443
    %v1598 = vunpack.c.l.b16 %v444
    %v1599 = vunpack.c.l.b16 %v445
    %v1600 = vunpack.c.h.b16 %v445
    %v1601 = vunpack.c.l.b16 %v446
    %v1602 = vunpack.c.h.b16 %v446
    %v1603 = vunpack.c.l.b16 %v447
    %v1604 = vunpack.c.h.b16 %v447
    %v1605 = vunpack.c.l.b16 %v448
    %v1606 = vunpack.c.l.b16 %v449
    %v1607 = vunpack.c.h.b16 %v449
    %v1608 = vunpack.c.l.b16 %v450
    %v1609 = vunpack.c.h.b16 %v450
    %v1610 = vunpack.c.l.b16 %v451
    %v1611 = vunpack.c.h.b16 %v451
    %v1612 = vunpack.c.l.b16 %v452
    %v1613 = vunpack.c.l.b16 %v453
    %v1614 = vunpack.c.h.b16 %v453
    %v1615 = vunpack.c.l.b16 %v454
    %v1616 = vunpack.c.h.b16 %v454
    %v1617 = vunpack.c.l.b16 %v455
    %v1618 = vunpack.c.h.b16 %v455
    %v1619 = vunpack.c.l.b16 %v456
    %v1620 = vunpack.c.l.b16 %v457
    %v1621 = vunpack.c.h.b16 %v457
    %v1622 = vunpack.c.l.b16 %v458
    %v1623 = vunpack.c.h.b16 %v458
    %v1624 = vunpack.c.l.b16 %v459
    %v1625 = vunpack.c.h.b16 %v459
    %v1626 = vunpack.c.l.b16 %v460
    %v1627 = vunpack.c.l.b16 %v461
    %v1628 = vunpack.c.h.b16 %v461
    %v1629 = vunpack.c.l.b16 %v462
    %v1630 = vunpack.c.h.b16 %v462
    %v1631 = vunpack.c.l.b16 %v463
    %v1632 = vunpack.c.h.b16 %v463
    %v1633 = vunpack.c.l.b16 %v464
    %v1634 = vunpack.c.l.b16 %v465
    %v1635 = vunpack.c.h.b16 %v465
    %v1636 = vunpack.c.l.b16 %v466
    %v1637 = vunpack.c.h.b16 %v466
    %v1638 = vunpack.c.l.b16 %v467
    %v1639 = vunpack.c.h.b16 %v467
    %v1640 = vunpack.c.l.b16 %v468
    %v1641 = vunpack.c.l.b16 %v469
    %v1642 = vunpack.c.h.b16 %v469
    %v1643 = vunpack.c.l.b16 %v470
    %v1644 = vunpack.c.h.b16 %v470
    %v1645 = vunpack.c.l.b16 %v471
    %v1646 = vunpack.c.h.b16 %v471
    %v1647 = vunpack.c.l.b16 %v472
    %v1648 = vunpack.c.l.b16 %v473
    %v1649 = vunpack.c.h.b16 %v473
    %v1650 = vunpack.c.l.b16 %v474
    %v1651 = vunpack.c.h.b16 %v474
    %v1652 = vunpack.c.l.b16 %v475
    %v1653 = vunpack.c.h.b16 %v475
    %v1654 = vunpack.c.l.b16 %v476
    %v1655 = vunpack.c.l.b16 %v477
    %v1656 = vunpack.c.h.b16 %v477
    %v1657 = vunpack.c.l.b16 %v478
    %v1658 = vunpack.c.h.b16 %v478
    %v1659 = vunpack.c.l.b16 %v479
    %v1660 = vunpack.c.h.b16 %v479
    %v1661 = vunpack.c.l.b16 %v480
    %v1662 = vunpack.c.l.b16 %v481
    %v1663 = vunpack.c.h.b16 %v481
    %v1664 = vunpack.c.l.b16 %v482
    %v1665 = vunpack.c.h.b16 %v482
    %v1666 = vunpack.c.l.b16 %v483
    %v1667 = vunpack.c.h.b16 %v483
    %v1668 = vunpack.c.l.b16 %v484
    %v1669 = vunpack.c.l.b16 %v485
    %v1670 = vunpack.c.h.b16 %v485
    %v1671 = vunpack.c.l.b16 %v486
    %v1672 = vunpack.c.h.b16 %v486
    %v1673 = vunpack.c.l.b16 %v487
    %v1674 = vunpack.c.h.b16 %v487
    %v1675 = vunpack.c.l.b16 %v488
    %v1676 = vunpack.c.l.b16 %v489
    %v1677 = vunpack.c.h.b16 %v489
    %v1678 = vunpack.c.l.b16 %v490
    %v1679 = vunpack.c.h.b16 %v490
    %v1680 = vunpack.c.l.b16 %v491
    %v1681 = vunpack.c.h.b16 %v491
    %v1682 = vunpack.c.l.b16 %v492
    %v1683 = vunpack.c.l.b16 %v493
    %v1684 = vunpack.c.h.b16 %v493
    %v1685 = vunpack.c.l.b16 %v494
    %v1686 = vunpack.c.h.b16 %v494
    %v1687 = vunpack.c.l.b16 %v495
    %v1688 = vunpack.c.h.b16 %v495
    %v1689 = vunpack.c.l.b16 %v496
    %v1690 = vunpack.c.l.b16 %v497
    %v1691 = vunpack.c.h.b16 %v497
    %v1692 = vunpack.c.l.b16 %v498
    %v1693 = vunpack.c.h.b16 %v498
    %v1694 = vunpack.c.l.b16 %v499
    %v1695 = vunpack.c.h.b16 %v499
    %v1696 = vunpack.c.l.b16 %v500
    %v1697 = vunpack.c.l.b16 %v501
    %v1698 = vunpack.c.h.b16 %v501
    %v1699 = vunpack.c.l.b16 %v502
    %v1700 = vunpack.c.h.b16 %v502
    %v1701 = vunpack.c.l.b16 %v503
    %v1702 = vunpack.c.h.b16 %v503
    %v1703 = vunpack.c.l.b16 %v504
    %v1704 = vunpack.c.l.b16 %v505
    %v1705 = vunpack.c.h.b16 %v505
    %v1706 = vunpack.c.l.b16 %v506
    %v1707 = vunpack.c.h.b16 %v506
    %v1708 = vunpack.c.l.b16 %v507
    %v1709 = vunpack.c.h.b16 %v507
    %v1710 = vunpack.c.l.b16 %v508
    %v1711 = vunpack.c.l.b16 %v509
    %v1712 = vunpack.c.h.b16 %v509
    %v1713 = vunpack.c.l.b16 %v510
    %v1714 = vunpack.c.h.b16 %v510
    %v1715 = vunpack.c.l.b16 %v511
    %v1716 = vunpack.c.h.b16 %v511
    %v1717 = vunpack.c.l.b16 %v512
    %v1718 = vunpack.c.l.b16 %v513
    %v1719 = vunpack.c.h.b16 %v513
    %v1720 = vunpack.c.l.b16 %v514
    %v1721 = vunpack.c.h.b16 %v514
    %v1722 = vunpack.c.l.b16 %v515
    %v1723 = vunpack.c.h.b16 %v515
    %v1724 = vunpack.c.l.b16 %v516
    %v1725 = vunpack.c.l.b16 %v517
    %v1726 = vunpack.c.h.b16 %v517
    %v1727 = vunpack.c.l.b16 %v518
    %v1728 = vunpack.c.h.b16 %v518
    %v1729 = vunpack.c.l.b16 %v519
    %v1730 = vunpack.c.h.b16 %v519
    %v1731 = vunpack.c.l.b16 %v520
    %v1732 = vunpack.c.l.b16 %v521
    %v1733 = vunpack.c.h.b16 %v521
    %v1734 = vunpack.c.l.b16 %v522
    %v1735 = vunpack.c.h.b16 %v522
    %v1736 = vunpack.c.l.b16 %v523
    %v1737 = vunpack.c.h.b16 %v523
    %v1738 = vunpack.c.l.b16 %v524
    %v1739 = vunpack.c.l.b16 %v525
    %v1740 = vunpack.c.h.b16 %v525
    %v1741 = vunpack.c.l.b16 %v526
    %v1742 = vunpack.c.h.b16 %v526
    %v1743 = vunpack.c.l.b16 %v527
    %v1744 = vunpack.c.h.b16 %v527
    %v1745 = vunpack.c.l.b16 %v528
    %v1746 = vunpack.c.l.b16 %v529
    %v1747 = vunpack.c.h.b16 %v529
    %v1748 = vunpack.c.l.b16 %v530
    %v1749 = vunpack.c.h.b16 %v530
    %v1750 = vunpack.c.l.b16 %v531
    %v1751 = vunpack.c.h.b16 %v531
    %v1752 = vunpack.c.l.b16 %v532
    %v1753 = vunpack.c.l.b16 %v533
    %v1754 = vunpack.c.h.b16 %v533
    %v1755 = vunpack.c.l.b16 %v534
    %v1756 = vunpack.c.h.b16 %v534
    %v1757 = vunpack.c.l.b16 %v535
    %v1758 = vunpack.c.h.b16 %v535
    %v1759 = vunpack.c.l.b16 %v536
    %v1760 = vunpack.c.l.b16 %v537
    %v1761 = vunpack.c.h.b16 %v537
    %v1762 = vunpack.c.l.b16 %v538
    %v1763 = vunpack.c.h.b16 %v538
    %v1764 = vunpack.c.l.b16 %v539
    %v1765 = vunpack.c.h.b16 %v539
    %v1766 = vunpack.c.l.b16 %v540
    %v1767 = vunpack.c.l.b16 %v541
    %v1768 = vunpack.c.h.b16 %v541
    %v1769 = vunpack.c.l.b16 %v542
    %v1770 = vunpack.c.h.b16 %v542
    %v1771 = vunpack.c.l.b16 %v543
    %v1772 = vunpack.c.h.b16 %v543
    %v1773 = vunpack.c.l.b16 %v544
    %v1774 = vunpack.c.l.b16 %v545
    %v1775 = vunpack.c.h.b16 %v545
    %v1776 = vunpack.c.l.b16 %v546
    %v1777 = vunpack.c.h.b16 %v546
    %v1778 = vunpack.c.l.b16 %v547
    %v1779 = vunpack.c.h.b16 %v547
    %v1780 = vunpack.c.l.b16 %v548
    %v1781 = vunpack.c.l.b16 %v549
    %v1782 = vunpack.c.h.b16 %v549
    %v1783 = vunpack.c.l.b16 %v550
    %v1784 = vunpack.c.h.b16 %v550
    %v1785 = vunpack.c.l.b16 %v551
    %v1786 = vunpack.c.h.b16 %v551
    %v1787 = vunpack.c.l.b16 %v552
    %v1788 = vunpack.c.l.b16 %v553
    %v1789 = vunpack.c.h.b16 %v553
    %v1790 = vunpack.c.l.b16 %v554
    %v1791 = vunpack.c.h.b16 %v554
    %v1792 = vunpack.c.l.b16 %v555
    %v1793 = vunpack.c.h.b16 %v555
    %v1794 = vunpack.c.l.b16 %v556
    %v1795 = vunpack.c.l.b16 %v557
    %v1796 = vunpack.c.h.b16 %v557
    %v1797 = vunpack.c.l.b16 %v558
    %v1798 = vunpack.c.h.b16 %v558
    %v1799 = vunpack.c.l.b16 %v559
    %v1800 = vunpack.c.h.b16 %v559
    %v1801 = vunpack.c.l.b16 %v560
    %v1802 = vunpack.c.l.b16 %v561
    %v1803 = vunpack.c.h.b16 %v561
    %v1804 = vunpack.c.l.b16 %v562
    %v1805 = vunpack.c.h.b16 %v562
    %v1806 = vunpack.c.l.b16 %v563
    %v1807 = vunpack.c.h.b16 %v563
    %v1808 = vunpack.c.l.b16 %v564
    %v1809 = vunpack.c.l.b16 %v565
    %v1810 = vunpack.c.h.b16 %v565
    %v1811 = vunpack.c.l.b16 %v566
    %v1812 = vunpack.c.h.b16 %v566
    %v1813 = vunpack.c.l.b16 %v567
    %v1814 = vunpack.c.h.b16 %v567
    %v1815 = vunpack.c.l.b16 %v568
    %v1816 = vunpack.c.l.b16 %v569
    %v1817 = vunpack.c.h.b16 %v569
    %v1818 = vunpack.c.l.b16 %v570
    %v1819 = vunpack.c.h.b16 %v570
    %v1820 = vunpack.c.l.b16 %v571
    %v1821 = vunpack.c.h.b16 %v571
    %v1822 = vunpack.c.l.b16 %v572
    %v1823 = vunpack.c.l.b16 %v573
    %v1824 = vunpack.c.h.b16 %v573
    %v1825 = vunpack.c.l.b16 %v574
    %v1826 = vunpack.c.h.b16 %v574
    %v1827 = vunpack.c.l.b16 %v575
    %v1828 = vunpack.c.h.b16 %v575
    %v1829 = vunpack.c.l.b16 %v576
    %v1830 = vunpack.c.l.b16 %v577
    %v1831 = vunpack.c.h.b16 %v577
    %v1832 = vunpack.c.l.b16 %v578
    %v1833 = vunpack.c.h.b16 %v578
    %v1834 = vunpack.c.l.b16 %v579
    %v1835 = vunpack.c.h.b16 %v579
    %v1836 = vunpack.c.l.b16 %v580
    %v1837 = vunpack.c.l.b16 %v581
    %v1838 = vunpack.c.h.b16 %v581
    %v1839 = vunpack.c.l.b16 %v582
    %v1840 = vunpack.c.h.b16 %v582
    %v1841 = vunpack.c.l.b16 %v583
    %v1842 = vunpack.c.h.b16 %v583
    %v1843 = vunpack.c.l.b16 %v584
    %v1844 = vunpack.c.l.b16 %v585
    %v1845 = vunpack.c.h.b16 %v585
    %v1846 = vunpack.c.l.b16 %v586
    %v1847 = vunpack.c.h.b16 %v586
    %v1848 = vunpack.c.l.b16 %v587
    %v1849 = vunpack.c.h.b16 %v587
    %v1850 = vunpack.c.l.b16 %v588
    %v1851 = vunpack.c.l.b16 %v589
    %v1852 = vunpack.c.h.b16 %v589
    %v1853 = vunpack.c.l.b16 %v590
    %v1854 = vunpack.c.h.b16 %v590
    %v1855 = vunpack.c.l.b16 %v591
    %v1856 = vunpack.c.h.b16 %v591
    %v1857 = vunpack.c.l.b16 %v592
    %v1858 = vunpack.c.l.b16 %v593
    %v1859 = vunpack.c.h.b16 %v593
    %v1860 = vunpack.c.l.b16 %v594
    %v1861 = vunpack.c.h.b16 %v594
    %v1862 = vunpack.c.l.b16 %v595
    %v1863 = vunpack.c.h.b16 %v595
    %v1864 = vunpack.c.l.b16 %v596
    %v1865 = vunpack.c.l.b16 %v597
    %v1866 = vunpack.c.h.b16 %v597
    %v1867 = vunpack.c.l.b16 %v598
    %v1868 = vunpack.c.h.b16 %v598
    %v1869 = vunpack.c.l.b16 %v599
    %v1870 = vunpack.c.h.b16 %v599
    %v1871 = vunpack.c.l.b16 %v600
    %v1872 = vunpack.c.l.b16 %v601
    %v1873 = vunpack.c.h.b16 %v601
    %v1874 = vunpack.c.l.b16 %v602
    %v1875 = vunpack.c.h.b16 %v602
    %v1876 = vunpack.c.l.b16 %v603
    %v1877 = vunpack.c.h.b16 %v603
    %v1878 = vunpack.c.l.b16 %v604
    %v1879 = vunpack.c.l.b16 %v605
    %v1880 = vunpack.c.h.b16 %v605
    %v1881 = vunpack.c.l.b16 %v606
    %v1882 = vunpack.c.h.b16 %v606
    %v1883 = vunpack.c.l.b16 %v607
    %v1884 = vunpack.c.h.b16 %v607
    %v1885 = vunpack.c.l.b16 %v608
    %v1886 = vunpack.c.l.b16 %v609
    %v1887 = vunpack.c.h.b16 %v609
    %v1888 = vunpack.c.l.b16 %v610
    %v1889 = vunpack.c.h.b16 %v610
    %v1890 = vunpack.c.l.b16 %v611
    %v1891 = vunpack.c.h.b16 %v611
    %v1892 = vunpack.c.l.b16 %v612
    %v1893 = vunpack.c.l.b16 %v613
    %v1894 = vunpack.c.h.b16 %v613
    %v1895 = vunpack.c.l.b16 %v614
    %v1896 = vunpack.c.h.b16 %v614
    %v1897 = vunpack.c.l.b16 %v615
    %v1898 = vunpack.c.h.b16 %v615
    %v1899 = vunpack.c.l.b16 %v616
    %v1900 = vunpack.c.l.b16 %v617
    %v1901 = vunpack.c.h.b16 %v617
    %v1902 = vunpack.c.l.b16 %v618
    %v1903 = vunpack.c.h.b16 %v618
    %v1904 = vunpack.c.l.b16 %v619
    %v1905 = vunpack.c.h.b16 %v619
    %v1906 = vunpack.c.l.b16 %v620
    %v1907 = vunpack.c.l.b16 %v621
    %v1908 = vunpack.c.h.b16 %v621
    %v1909 = vunpack.c.l.b16 %v622
    %v1910 = vunpack.c.h.b16 %v622
    %v1911 = vunpack.c.l.b16 %v623
    %v1912 = vunpack.c.h.b16 %v623
    %v1913 = vunpack.c.l.b16 %v624
    %v1914 = vunpack.c.l.b16 %v625
    %v1915 = vunpack.c.h.b16 %v625
    %v1916 = vunpack.c.l.b16 %v626
    %v1917 = vunpack.c.h.b16 %v626
    %v1918 = vunpack.c.l.b16 %v627
    %v1919 = vunpack.c.h.b16 %v627
    %v1920 = vunpack.c.l.b16 %v628
    %v1921 = vunpack.c.l.b16 %v629
    %v1922 = vunpack.c.h.b16 %v629
    %v1923 = vunpack.c.l.b16 %v630
    %v1924 = vunpack.c.h.b16 %v630
    %v1925 = vunpack.c.l.b16 %v631
    %v1926 = vunpack.c.h.b16 %v631
    %v1927 = vunpack.c.l.b16 %v632
    %v1928 = vunpack.c.l.b16 %v633
    %v1929 = vunpack.c.h.b16 %v633
    %v1930 = vunpack.c.l.b16 %v634
    %v1931 = vunpack.c.h.b16 %v634
    %v1932 = vunpack.c.l.b16 %v635
    %v1933 = vunpack.c.h.b16 %v635
    %v1934 = vunpack.c.l.b16 %v636
    %v1935 = vunpack.c.l.b16 %v637
    %v1936 = vunpack.c.h.b16 %v637
    %v1937 = vunpack.c.l.b16 %v638
    %v1938 = vunpack.c.h.b16 %v638
    %v1939 = vunpack.c.l.b16 %v639
    %v1940 = vunpack.c.h.b16 %v639
    %v1941 = vunpack.c.l.b16 %v640
    %v1942 = vunpack.c.l.b16 %v641
    %v1943 = vunpack.c.h.b16 %v641
    %v1944 = vunpack.c.l.b16 %v642
    %v1945 = vunpack.c.h.b16 %v642
    %v1946 = vunpack.c.l.b16 %v643
    %v1947 = vunpack.c.h.b16 %v643
    %v1948 = vunpack.c.l.b16 %v644
    %v1949 = vunpack.c.l.b16 %v645
    %v1950 = vunpack.c.h.b16 %v645
    %v1951 = vunpack.c.l.b16 %v646
    %v1952 = vunpack.c.h.b16 %v646
    %v1953 = vunpack.c.l.b16 %v647
    %v1954 = vunpack.c.h.b16 %v647
    %v1955 = vunpack.c.l.b16 %v648
    %v1956 = vunpack.c.l.b16 %v649
    %v1957 = vunpack.c.h.b16 %v649
    %v1958 = vunpack.c.l.b16 %v650
    %v1959 = vunpack.c.h.b16 %v650
    %v1960 = vunpack.c.l.b16 %v651
    %v1961 = vunpack.c.h.b16 %v651
    %v1962 = vunpack.c.l.b16 %v652
    %v1963 = vunpack.c.l.b16 %v653
    %v1964 = vunpack.c.h.b16 %v653
    %v1965 = vunpack.c.l.b16 %v654
    %v1966 = vunpack.c.h.b16 %v654
    %v1967 = vunpack.c.l.b16 %v655
    %v1968 = vunpack.c.h.b16 %v655
    %v1969 = vunpack.c.l.b16 %v656
    %v1970 = vunpack.c.l.b16 %v657
    %v1971 = vunpack.c.h.b16 %v657
    %v1972 = vunpack.c.l.b16 %v658
    %v1973 = vunpack.c.h.b16 %v658
    %v1974 = vunpack.c.l.b16 %v659
    %v1975 = vunpack.c.h.b16 %v659
    %v1976 = vunpack.c.l.b16 %v660
    %v1977 = vunpack.c.l.b16 %v661
    %v1978 = vunpack.c.h.b16 %v661
    %v1979 = vunpack.c.l.b16 %v662
    %v1980 = vunpack.c.h.b16 %v662
    %v1981 = vunpack.c.l.b16 %v663
    %v1982 = vunpack.c.h.b16 %v663
    %v1983 = vunpack.c.l.b16 %v664
    %v1984 = vunpack.c.l.b16 %v665
    %v1985 = vunpack.c.h.b16 %v665
    %v1986 = vunpack.c.l.b16 %v666
    %v1987 = vunpack.c.h.b16 %v666
    %v1988 = vunpack.c.l.b16 %v667
    %v1989 = vunpack.c.h.b16 %v667
    %v1990 = vunpack.c.l.b16 %v668
    %v1991 = vunpack.c.l.b16 %v669
    %v1992 = vunpack.c.h.b16 %v669
    %v1993 = vunpack.c.l.b16 %v670
    %v1994 = vunpack.c.h.b16 %v670
    %v1995 = vunpack.c.l.b16 %v671
    %v1996 = vunpack.c.h.b16 %v671
    %v1997 = vunpack.c.l.b16 %v672
    %v1998 = vunpack.c.l.b16 %v673
    %v1999 = vunpack.c.h.b16 %v673
    %v2000 = vunpack.c.l.b16 %v674
    %v2001 = vunpack.c.h.b16 %v674
    %v2002 = vunpack.c.l.b16 %v675
    %v2003 = vunpack.c.h.b16 %v675
    %v2004 = vunpack.c.l.b16 %v676
    %v2005 = vunpack.c.l.b16 %v677
    %v2006 = vunpack.c.h.b16 %v677
    %v2007 = vunpack.c.l.b16 %v678
    %v2008 = vunpack.c.h.b16 %v678
    %v2009 = vunpack.c.l.b16 %v679
    %v2010 = vunpack.c.h.b16 %v679
    %v2011 = vunpack.c.l.b16 %v680
    %v2012 = vunpack.c.l.b16 %v681
    %v2013 = vunpack.c.h.b16 %v681
    %v2014 = vunpack.c.l.b16 %v682
    %v2015 = vunpack.c.h.b16 %v682
    %v2016 = vunpack.c.l.b16 %v683
    %v2017 = vunpack.c.h.b16 %v683
    %v2018 = vunpack.c.l.b16 %v684
    %v2019 = vunpack.c.l.b16 %v685
    %v2020 = vunpack.c.h.b16 %v685
    %v2021 = vunpack.c.l.b16 %v686
    %v2022 = vunpack.c.h.b16 %v686
    %v2023 = vunpack.c.l.b16 %v687
    %v2024 = vunpack.c.h.b16 %v687
    %v2025 = vunpack.c.l.b16 %v688
    %v2026 = vunpack.c.l.b16 %v689
    %v2027 = vunpack.c.h.b16 %v689
    %v2028 = vunpack.c.l.b16 %v690
    %v2029 = vunpack.c.h.b16 %v690
    %v2030 = vunpack.c.l.b16 %v691
    %v2031 = vunpack.c.h.b16 %v691
    %v2032 = vunpack.c.l.b16 %v692
    %v2033 = vunpack.c.l.b16 %v693
    %v2034 = vunpack.c.h.b16 %v693
    %v2035 = vunpack.c.l.b16 %v694
    %v2036 = vunpack.c.h.b16 %v694
    %v2037 = vunpack.c.l.b16 %v695
    %v2038 = vunpack.c.h.b16 %v695
    %v2039 = vunpack.c.l.b16 %v696
    %v2040 = vunpack.c.l.b16 %v697
    %v2041 = vunpack.c.h.b16 %v697
    %v2042 = vunpack.c.l.b16 %v698
    %v2043 = vunpack.c.h.b16 %v698
    %v2044 = vunpack.c.l.b16 %v699
    %v2045 = vunpack.c.h.b16 %v699
    %v2046 = vunpack.c.l.b16 %v700
    %v2047 = vunpack.c.l.b16 %v701
    %v2048 = vunpack.c.h.b16 %v701
    %v2049 = vunpack.c.l.b16 %v702
    %v2050 = vunpack.c.h.b16 %v702
    %v2051 = vunpack.c.l.b16 %v703
    %v2052 = vunpack.c.h.b16 %v703
    %v2053 = vunpack.c.l.b16 %v704
    %v2054 = vunpack.c.l.b16 %v705
    %v2055 = vunpack.c.h.b16 %v705
    %v2056 = vunpack.c.l.b16 %v706
    %v2057 = vunpack.c.h.b16 %v706
    %v2058 = vunpack.c.l.b16 %v707
    %v2059 = vunpack.c.h.b16 %v707
    %v2060 = vunpack.c.l.b16 %v708
    %v2061 = vunpack.c.l.b16 %v709
    %v2062 = vunpack.c.h.b16 %v709
    %v2063 = vunpack.c.l.b16 %v710
    %v2064 = vunpack.c.h.b16 %v710
    %v2065 = vunpack.c.l.b16 %v711
    %v2066 = vunpack.c.h.b16 %v711
    %v2067 = vunpack.c.l.b16 %v712
    %v2068 = vunpack.c.l.b16 %v713
    %v2069 = vunpack.c.h.b16 %v713
    %v2070 = vunpack.c.l.b16 %v714
    %v2071 = vunpack.c.h.b16 %v714
    %v2072 = vunpack.c.l.b16 %v715
    %v2073 = vunpack.c.h.b16 %v715
    %v2074 = vunpack.c.l.b16 %v716
    %v2075 = vunpack.c.l.b16 %v717
    %v2076 = vunpack.c.h.b16 %v717
    %v2077 = vunpack.c.l.b16 %v718
    %v2078 = vunpack.c.h.b16 %v718
    %v2079 = vunpack.c.l.b16 %v719
    %v2080 = vunpack.c.h.b16 %v719
    %v2081 = vunpack.c.l.b16 %v720
    %v2082 = vunpack.c.l.b16 %v721
    %v2083 = vunpack.c.h.b16 %v721
    %v2084 = vunpack.c.l.b16 %v722
    %v2085 = vunpack.c.h.b16 %v722
    %v2086 = vunpack.c.l.b16 %v723
    %v2087 = vunpack.c.h.b16 %v723
    %v2088 = vunpack.c.l.b16 %v724
    %v2089 = vunpack.c.l.b16 %v725
    %v2090 = vunpack.c.h.b16 %v725
    %v2091 = vunpack.c.l.b16 %v726
    %v2092 = vunpack.c.h.b16 %v726
    %v2093 = vunpack.c.l.b16 %v727
    %v2094 = vunpack.c.h.b16 %v727
    %v2095 = vunpack.c.l.b16 %v728
    %v2096 = vunpack.c.l.b16 %v729
    %v2097 = vunpack.c.h.b16 %v729
    %v2098 = vunpack.c.l.b16 %v730
    %v2099 = vunpack.c.h.b16 %v730
    %v2100 = vunpack.c.l.b16 %v731
    %v2101 = vunpack.c.h.b16 %v731
    %v2102 = vunpack.c.l.b16 %v732
    %v2103 = vunpack.c.l.b16 %v733
    %v2104 = vunpack.c.h.b16 %v733
    %v2105 = vunpack.c.l.b16 %v734
    %v2106 = vunpack.c.h.b16 %v734
    %v2107 = vunpack.c.l.b16 %v735
    %v2108 = vunpack.c.h.b16 %v735
    %v2109 = vunpack.c.l.b16 %v736
    %v2110 = vunpack.c.l.b16 %v737
    %v2111 = vunpack.c.h.b16 %v737
    %v2112 = vunpack.c.l.b16 %v738
    %v2113 = vunpack.c.h.b16 %v738
    %v2114 = vunpack.c.l.b16 %v739
    %v2115 = vunpack.c.h.b16 %v739
    %v2116 = vunpack.c.l.b16 %v740
    %v2117 = vunpack.c.l.b16 %v741
    %v2118 = vunpack.c.h.b16 %v741
    %v2119 = vunpack.c.l.b16 %v742
    %v2120 = vunpack.c.h.b16 %v742
    %v2121 = vunpack.c.l.b16 %v743
    %v2122 = vunpack.c.h.b16 %v743
    %v2123 = vunpack.c.l.b16 %v744
    %v2124 = vunpack.c.l.b16 %v745
    %v2125 = vunpack.c.h.b16 %v745
    %v2126 = vunpack.c.l.b16 %v746
    %v2127 = vunpack.c.h.b16 %v746
    %v2128 = vunpack.c.l.b16 %v747
    %v2129 = vunpack.c.h.b16 %v747
    %v2130 = vunpack.c.l.b16 %v748
    %v2131 = vunpack.c.l.b16 %v749
    %v2132 = vunpack.c.h.b16 %v749
    %v2133 = vunpack.c.l.b16 %v750
    %v2134 = vunpack.c.h.b16 %v750
    %v2135 = vunpack.c.l.b16 %v751
    %v2136 = vunpack.c.h.b16 %v751
    %v2137 = vunpack.c.l.b16 %v752
    %v2138 = vunpack.c.l.b16 %v753
    %v2139 = vunpack.c.h.b16 %v753
    %v2140 = vunpack.c.l.b16 %v754
    %v2141 = vunpack.c.h.b16 %v754
    %v2142 = vunpack.c.l.b16 %v755
    %v2143 = vunpack.c.h.b16 %v755
    %v2144 = vunpack.c.l.b16 %v756
    %v2145 = vunpack.c.l.b16 %v757
    %v2146 = vunpack.c.h.b16 %v757
    %v2147 = vunpack.c.l.b16 %v758
    %v2148 = vunpack.c.h.b16 %v758
    %v2149 = vunpack.c.l.b16 %v759
    %v2150 = vunpack.c.h.b16 %v759
    %v2151 = vunpack.c.l.b16 %v760
    %v2152 = vunpack.c.l.b16 %v761
    %v2153 = vunpack.c.h.b16 %v761
    %v2154 = vunpack.c.l.b16 %v762
    %v2155 = vunpack.c.h.b16 %v762
    %v2156 = vunpack.c.l.b16 %v763
    %v2157 = vunpack.c.h.b16 %v763
    %v2158 = vunpack.c.l.b16 %v764
    %v2159 = vunpack.c.l.b16 %v765
    %v2160 = vunpack.c.h.b16 %v765
    %v2161 = vunpack.c.l.b16 %v766
    %v2162 = vunpack.c.h.b16 %v766
    %v2163 = vunpack.c.l.b16 %v767
    %v2164 = vunpack.c.h.b16 %v767
    %v2165 = vunpack.c.l.b16 %v768
    %v2166 = vunpack.c.l.b16 %v769
    %v2167 = vunpack.c.h.b16 %v769
    %v2168 = vunpack.c.l.b16 %v770
    %v2169 = vunpack.c.h.b16 %v770
    %v2170 = vunpack.c.l.b16 %v771
    %v2171 = vunpack.c.h.b16 %v771
    %v2172 = vunpack.c.l.b16 %v772
    %v2173 = vunpack.c.l.b16 %v773
    %v2174 = vunpack.c.h.b16 %v773
    %v2175 = vunpack.c.l.b16 %v774
    %v2176 = vunpack.c.h.b16 %v774
    %v2177 = vunpack.c.l.b16 %v775
    %v2178 = vunpack.c.h.b16 %v775
    %v2179 = vunpack.c.l.b16 %v776
    %v2180 = vunpack.c.l.b16 %v777
    %v2181 = vunpack.c.h.b16 %v777
    %v2182 = vunpack.c.l.b16 %v778
    %v2183 = vunpack.c.h.b16 %v778
    %v2184 = vunpack.c.l.b16 %v779
    %v2185 = vunpack.c.h.b16 %v779
    %v2186 = vunpack.c.l.b16 %v780
    %v2187 = vunpack.c.l.b16 %v781
    %v2188 = vunpack.c.h.b16 %v781
    %v2189 = vunpack.c.l.b16 %v782
    %v2190 = vunpack.c.h.b16 %v782
    %v2191 = vunpack.c.l.b16 %v783
    %v2192 = vunpack.c.h.b16 %v783
    %v2193 = vunpack.c.l.b16 %v784
    %v2194 = vunpack.c.l.b16 %v785
    %v2195 = vunpack.c.h.b16 %v785
    %v2196 = vunpack.c.l.b16 %v786
    %v2197 = vunpack.c.h.b16 %v786
    %v2198 = vunpack.c.l.b16 %v787
    %v2199 = vunpack.c.h.b16 %v787
    %v2200 = vunpack.c.l.b16 %v788
    %v2201 = vunpack.c.l.b16 %v789
    %v2202 = vunpack.c.h.b16 %v789
    %v2203 = vunpack.c.l.b16 %v790
    %v2204 = vunpack.c.h.b16 %v790
    %v2205 = vunpack.c.l.b16 %v791
    %v2206 = vunpack.c.h.b16 %v791
    %v2207 = vunpack.c.l.b16 %v792
    %v2208 = vunpack.c.l.b16 %v793
    %v2209 = vunpack.c.h.b16 %v793
    %v2210 = vunpack.c.l.b16 %v794
    %v2211 = vunpack.c.h.b16 %v794
    %v2212 = vunpack.c.l.b16 %v795
    %v2213 = vunpack.c.h.b16 %v795
    %v2214 = vunpack.c.l.b16 %v796
    %v2215 = vunpack.c.l.b16 %v797
    %v2216 = vunpack.c.h.b16 %v797
    %v2217 = vunpack.c.l.b16 %v798
    %v2218 = vunpack.c.h.b16 %v798
    %v2219 = vunpack.c.l.b16 %v799
    %v2220 = vunpack.c.h.b16 %v799
    %v2221 = vunpack.c.l.b16 %v800
    %v2222 = vunpack.c.l.b16 %v801
    %v2223 = vunpack.c.h.b16 %v801
    %v2224 = vunpack.c.l.b16 %v802
    %v2225 = vunpack.c.h.b16 %v802
    %v2226 = vunpack.c.l.b16 %v803
    %v2227 = vunpack.c.h.b16 %v803
    %v2228 = vunpack.c.l.b16 %v804
    %v2229 = vpack.c.b16 %v1340, %v1333
    %v2230 = vpack.c.b16 %v1341, %v1334
    %v2231 = vpack.c.b16 %v1342, %v1335
    %v2232 = vpack.c.b16 %v1343, %v1336
    %v2233 = vpack.c.b16 %v1344, %v1337
    %v2234 = vpack.c.b16 %v1345, %v1338
    %v2235 = vpack.c.b16 %v1346, %v1339
    %v2236 = vpack.c.b16 %v1354, %v1347
    %v2237 = vpack.c.b16 %v1355, %v1348
    %v2238 = vpack.c.b16 %v1356, %v1349
    %v2239 = vpack.c.b16 %v1357, %v1350
    %v2240 = vpack.c.b16 %v1358, %v1351
    %v2241 = vpack.c.b16 %v1359, %v1352
    %v2242 = vpack.c.b16 %v1360, %v1353
    %v2243 = vpack.c.b16 %v1368, %v1361
    %v2244 = vpack.c.b16 %v1369, %v1362
    %v2245 = vpack.c.b16 %v1370, %v1363
    %v2246 = vpack.c.b16 %v1371, %v1364
    %v2247 = vpack.c.b16 %v1372, %v1365
    %v2248 = vpack.c.b16 %v1373, %v1366
    %v2249 = vpack.c.b16 %v1374, %v1367
    %v2250 = vpack.c.b16 %v1382, %v1375
    %v2251 = vpack.c.b16 %v1383, %v1376
    %v2252 = vpack.c.b16 %v1384, %v1377
    %v2253 = vpack.c.b16 %v1385, %v1378
    %v2254 = vpack.c.b16 %v1386, %v1379
    %v2255 = vpack.c.b16 %v1387, %v1380
    %v2256 = vpack.c.b16 %v1388, %v1381
    %v2257 = vpack.c.b16 %v1396, %v1389
    %v2258 = vpack.c.b16 %v1397, %v1390
    %v2259 = vpack.c.b16 %v1398, %v1391
    %v2260 = vpack.c.b16 %v1399, %v1392
    %v2261 = vpack.c.b16 %v1400, %v1393
    %v2262 = vpack.c.b16 %v1401, %v1394
    %v2263 = vpack.c.b16 %v1402, %v1395
    %v2264 = vpack.c.b16 %v1410, %v1403
    %v2265 = vpack.c.b16 %v1411, %v1404
    %v2266 = vpack.c.b16 %v1412, %v1405
    %v2267 = vpack.c.b16 %v1413, %v1406
    %v2268 = vpack.c.b16 %v1414, %v1407
    %v2269 = vpack.c.b16 %v1415, %v1408
    %v2270 = vpack.c.b16 %v1416, %v1409
    %v2271 = vpack.c.b16 %v1424, %v1417
    %v2272 = vpack.c.b16 %v1425, %v1418
    %v2273 = vpack.c.b16 %v1426, %v1419
    %v2274 = vpack.c.b16 %v1427, %v1420
    %v2275 = vpack.c.b16 %v1428, %v1421
    %v2276 = vpack.c.b16 %v1429, %v1422
    %v2277 = vpack.c.b16 %v1430, %v1423
    %v2278 = vpack.c.b16 %v1438, %v1431
    %v2279 = vpack.c.b16 %v1439, %v1432
    %v2280 = vpack.c.b16 %v1440, %v1433
    %v2281 = vpack.c.b16 %v1441, %v1434
    %v2282 = vpack.c.b16 %v1442, %v1435
    %v2283 = vpack.c.b16 %v1443, %v1436
    %v2284 = vpack.c.b16 %v1444, %v1437
    %v2285 = vpack.c.b16 %v1452, %v1445
    %v2286 = vpack.c.b16 %v1453, %v1446
    %v2287 = vpack.c.b16 %v1454, %v1447
    %v2288 = vpack.c.b16 %v1455, %v1448
    %v2289 = vpack.c.b16 %v1456, %v1449
    %v2290 = vpack.c.b16 %v1457, %v1450
    %v2291 = vpack.c.b16 %v1458, %v1451
    %v2292 = vpack.c.b16 %v1466, %v1459
    %v2293 = vpack.c.b16 %v1467, %v1460
    %v2294 = vpack.c.b16 %v1468, %v1461
    %v2295 = vpack.c.b16 %v1469, %v1462
    %v2296 = vpack.c.b16 %v1470, %v1463
    %v2297 = vpack.c.b16 %v1471, %v1464
    %v2298 = vpack.c.b16 %v1472, %v1465
    %v2299 = vpack.c.b16 %v1480, %v1473
    %v2300 = vpack.c.b16 %v1481, %v1474
    %v2301 = vpack.c.b16 %v1482, %v1475
    %v2302 = vpack.c.b16 %v1483, %v1476
    %v2303 = vpack.c.b16 %v1484, %v1477
    %v2304 = vpack.c.b16 %v1485, %v1478
    %v2305 = vpack.c.b16 %v1486, %v1479
    %v2306 = vpack.c.b16 %v1494, %v1487
    %v2307 = vpack.c.b16 %v1495, %v1488
    %v2308 = vpack.c.b16 %v1496, %v1489
    %v2309 = vpack.c.b16 %v1497, %v1490
    %v2310 = vpack.c.b16 %v1498, %v1491
    %v2311 = vpack.c.b16 %v1499, %v1492
    %v2312 = vpack.c.b16 %v1500, %v1493
    %v2313 = vpack.c.b16 %v1508, %v1501
    %v2314 = vpack.c.b16 %v1509, %v1502
    %v2315 = vpack.c.b16 %v1510, %v1503
    %v2316 = vpack.c.b16 %v1511, %v1504
    %v2317 = vpack.c.b16 %v1512, %v1505
    %v2318 = vpack.c.b16 %v1513, %v1506
    %v2319 = vpack.c.b16 %v1514, %v1507
    %v2320 = vpack.c.b16 %v1522, %v1515
    %v2321 = vpack.c.b16 %v1523, %v1516
    %v2322 = vpack.c.b16 %v1524, %v1517
    %v2323 = vpack.c.b16 %v1525, %v1518
    %v2324 = vpack.c.b16 %v1526, %v1519
    %v2325 = vpack.c.b16 %v1527, %v1520
    %v2326 = vpack.c.b16 %v1528, %v1521
    %v2327 = vpack.c.b16 %v1536, %v1529
    %v2328 = vpack.c.b16 %v1537, %v1530
    %v2329 = vpack.c.b16 %v1538, %v1531
    %v2330 = vpack.c.b16 %v1539, %v1532
    %v2331 = vpack.c.b16 %v1540, %v1533
    %v2332 = vpack.c.b16 %v1541, %v1534
    %v2333 = vpack.c.b16 %v1542, %v1535
    %v2334 = vpack.c.b16 %v1550, %v1543
    %v2335 = vpack.c.b16 %v1551, %v1544
    %v2336 = vpack.c.b16 %v1552, %v1545
    %v2337 = vpack.c.b16 %v1553, %v1546
    %v2338 = vpack.c.b16 %v1554, %v1547
    %v2339 = vpack.c.b16 %v1555, %v1548
    %v2340 = vpack.c.b16 %v1556, %v1549
    %v2341 = vpack.c.b16 %v1564, %v1557
    %v2342 = vpack.c.b16 %v1565, %v1558
    %v2343 = vpack.c.b16 %v1566, %v1559
    %v2344 = vpack.c.b16 %v1567, %v1560
    %v2345 = vpack.c.b16 %v1568, %v1561
    %v2346 = vpack.c.b16 %v1569, %v1562
    %v2347 = vpack.c.b16 %v1570, %v1563
    %v2348 = vpack.c.b16 %v1578, %v1571
    %v2349 = vpack.c.b16 %v1579, %v1572
    %v2350 = vpack.c.b16 %v1580, %v1573
    %v2351 = vpack.c.b16 %v1581, %v1574
    %v2352 = vpack.c.b16 %v1582, %v1575
    %v2353 = vpack.c.b16 %v1583, %v1576
    %v2354 = vpack.c.b16 %v1584, %v1577
    %v2355 = vpack.c.b16 %v1592, %v1585
    %v2356 = vpack.c.b16 %v1593, %v1586
    %v2357 = vpack.c.b16 %v1594, %v1587
    %v2358 = vpack.c.b16 %v1595, %v1588
    %v2359 = vpack.c.b16 %v1596, %v1589
    %v2360 = vpack.c.b16 %v1597, %v1590
    %v2361 = vpack.c.b16 %v1598, %v1591
    %v2362 = vpack.c.b16 %v1606, %v1599
    %v2363 = vpack.c.b16 %v1607, %v1600
    %v2364 = vpack.c.b16 %v1608, %v1601
    %v2365 = vpack.c.b16 %v1609, %v1602
    %v2366 = vpack.c.b16 %v1610, %v1603
    %v2367 = vpack.c.b16 %v1611, %v1604
    %v2368 = vpack.c.b16 %v1612, %v1605
    %v2369 = vpack.c.b16 %v1620, %v1613
    %v2370 = vpack.c.b16 %v1621, %v1614
    %v2371 = vpack.c.b16 %v1622, %v1615
    %v2372 = vpack.c.b16 %v1623, %v1616
    %v2373 = vpack.c.b16 %v1624, %v1617
    %v2374 = vpack.c.b16 %v1625, %v1618
    %v2375 = vpack.c.b16 %v1626, %v1619
    %v2376 = vpack.c.b16 %v1634, %v1627
    %v2377 = vpack.c.b16 %v1635, %v1628
    %v2378 = vpack.c.b16 %v1636, %v1629
    %v2379 = vpack.c.b16 %v1637, %v1630
    %v2380 = vpack.c.b16 %v1638, %v1631
    %v2381 = vpack.c.b16 %v1639, %v1632
    %v2382 = vpack.c.b16 %v1640, %v1633
    %v2383 = vpack.c.b16 %v1648, %v1641
    %v2384 = vpack.c.b16 %v1649, %v1642
    %v2385 = vpack.c.b16 %v1650, %v1643
    %v2386 = vpack.c.b16 %v1651, %v1644
    %v2387 = vpack.c.b16 %v1652, %v1645
    %v2388 = vpack.c.b16 %v1653, %v1646
    %v2389 = vpack.c.b16 %v1654, %v1647
    %v2390 = vpack.c.b16 %v1662, %v1655
    %v2391 = vpack.c.b16 %v1663, %v1656
    %v2392 = vpack.c.b16 %v1664, %v1657
    %v2393 = vpack.c.b16 %v1665, %v1658
    %v2394 = vpack.c.b16 %v1666, %v1659
    %v2395 = vpack.c.b16 %v1667, %v1660
    %v2396 = vpack.c.b16 %v1668, %v1661
    %v2397 = vpack.c.b16 %v1676, %v1669
    %v2398 = vpack.c.b16 %v1677, %v1670
    %v2399 = vpack.c.b16 %v1678, %v1671
    %v2400 = vpack.c.b16 %v1679, %v1672
    %v2401 = vpack.c.b16 %v1680, %v1673
    %v2402 = vpack.c.b16 %v1681, %v1674
    %v2403 = vpack.c.b16 %v1682, %v1675
    %v2404 = vpack.c.b16 %v1690, %v1683
    %v2405 = vpack.c.b16 %v1691, %v1684
    %v2406 = vpack.c.b16 %v1692, %v1685
    %v2407 = vpack.c.b16 %v1693, %v1686
    %v2408 = vpack.c.b16 %v1694, %v1687
    %v2409 = vpack.c.b16 %v1695, %v1688
    %v2410 = vpack.c.b16 %v1696, %v1689
    %v2411 = vpack.c.b16 %v1704, %v1697
    %v2412 = vpack.c.b16 %v1705, %v1698
    %v2413 = vpack.c.b16 %v1706, %v1699
    %v2414 = vpack.c.b16 %v1707, %v1700
    %v2415 = vpack.c.b16 %v1708, %v1701
    %v2416 = vpack.c.b16 %v1709, %v1702
    %v2417 = vpack.c.b16 %v1710, %v1703
    %v2418 = vpack.c.b16 %v1718, %v1711
    %v2419 = vpack.c.b16 %v1719, %v1712
    %v2420 = vpack.c.b16 %v1720, %v1713
    %v2421 = vpack.c.b16 %v1721, %v1714
    %v2422 = vpack.c.b16 %v1722, %v1715
    %v2423 = vpack.c.b16 %v1723, %v1716
    %v2424 = vpack.c.b16 %v1724, %v1717
    %v2425 = vpack.c.b16 %v1732, %v1725
    %v2426 = vpack.c.b16 %v1733, %v1726
    %v2427 = vpack.c.b16 %v1734, %v1727
    %v2428 = vpack.c.b16 %v1735, %v1728
    %v2429 = vpack.c.b16 %v1736, %v1729
    %v2430 = vpack.c.b16 %v1737, %v1730
    %v2431 = vpack.c.b16 %v1738, %v1731
    %v2432 = vpack.c.b16 %v1746, %v1739
    %v2433 = vpack.c.b16 %v1747, %v1740
    %v2434 = vpack.c.b16 %v1748, %v1741
    %v2435 = vpack.c.b16 %v1749, %v1742
    %v2436 = vpack.c.b16 %v1750, %v1743
    %v2437 = vpack.c.b16 %v1751, %v1744
    %v2438 = vpack.c.b16 %v1752, %v1745
    %v2439 = vpack.c.b16 %v1760, %v1753
    %v2440 = vpack.c.b16 %v1761, %v1754
    %v2441 = vpack.c.b16 %v1762, %v1755
    %v2442 = vpack.c.b16 %v1763, %v1756
    %v2443 = vpack.c.b16 %v1764, %v1757
    %v2444 = vpack.c.b16 %v1765, %v1758
    %v2445 = vpack.c.b16 %v1766, %v1759
    %v2446 = vpack.c.b16 %v1774, %v1767
    %v2447 = vpack.c.b16 %v1775, %v1768
    %v2448 = vpack.c.b16 %v1776, %v1769
    %v2449 = vpack.c.b16 %v1777, %v1770
    %v2450 = vpack.c.b16 %v1778, %v1771
    %v2451 = vpack.c.b16 %v1779, %v1772
    %v2452 = vpack.c.b16 %v1780, %v1773
    %v2453 = vpack.c.b16 %v1788, %v1781
    %v2454 = vpack.c.b16 %v1789, %v1782
    %v2455 = vpack.c.b16 %v1790, %v1783
    %v2456 = vpack.c.b16 %v1791, %v1784
    %v2457 = vpack.c.b16 %v1792, %v1785
    %v2458 = vpack.c.b16 %v1793, %v1786
    %v2459 = vpack.c.b16 %v1794, %v1787
    %v2460 = vpack.c.b16 %v1802, %v1795
    %v2461 = vpack.c.b16 %v1803, %v1796
    %v2462 = vpack.c.b16 %v1804, %v1797
    %v2463 = vpack.c.b16 %v1805, %v1798
    %v2464 = vpack.c.b16 %v1806, %v1799
    %v2465 = vpack.c.b16 %v1807, %v1800
    %v2466 = vpack.c.b16 %v1808, %v1801
    %v2467 = vpack.c.b16 %v1816, %v1809
    %v2468 = vpack.c.b16 %v1817, %v1810
    %v2469 = vpack.c.b16 %v1818, %v1811
    %v2470 = vpack.c.b16 %v1819, %v1812
    %v2471 = vpack.c.b16 %v1820, %v1813
    %v2472 = vpack.c.b16 %v1821, %v1814
    %v2473 = vpack.c.b16 %v1822, %v1815
    %v2474 = vpack.c.b16 %v1830, %v1823
    %v2475 = vpack.c.b16 %v1831, %v1824
    %v2476 = vpack.c.b16 %v1832, %v1825
    %v2477 = vpack.c.b16 %v1833, %v1826
    %v2478 = vpack.c.b16 %v1834, %v1827
    %v2479 = vpack.c.b16 %v1835, %v1828
    %v2480 = vpack.c.b16 %v1836, %v1829
    %v2481 = vpack.c.b16 %v1844, %v1837
    %v2482 = vpack.c.b16 %v1845, %v1838
    %v2483 = vpack.c.b16 %v1846, %v1839
    %v2484 = vpack.c.b16 %v1847, %v1840
    %v2485 = vpack.c.b16 %v1848, %v1841
    %v2486 = vpack.c.b16 %v1849, %v1842
    %v2487 = vpack.c.b16 %v1850, %v1843
    %v2488 = vpack.c.b16 %v1858, %v1851
    %v2489 = vpack.c.b16 %v1859, %v1852
    %v2490 = vpack.c.b16 %v1860, %v1853
    %v2491 = vpack.c.b16 %v1861, %v1854
    %v2492 = vpack.c.b16 %v1862, %v1855
    %v2493 = vpack.c.b16 %v1863, %v1856
    %v2494 = vpack.c.b16 %v1864, %v1857
    %v2495 = vpack.c.b16 %v1872, %v1865
    %v2496 = vpack.c.b16 %v1873, %v1866
    %v2497 = vpack.c.b16 %v1874, %v1867
    %v2498 = vpack.c.b16 %v1875, %v1868
    %v2499 = vpack.c.b16 %v1876, %v1869
    %v2500 = vpack.c.b16 %v1877, %v1870
    %v2501 = vpack.c.b16 %v1878, %v1871
    %v2502 = vpack.c.b16 %v1886, %v1879
    %v2503 = vpack.c.b16 %v1887, %v1880
    %v2504 = vpack.c.b16 %v1888, %v1881
    %v2505 = vpack.c.b16 %v1889, %v1882
    %v2506 = vpack.c.b16 %v1890, %v1883
    %v2507 = vpack.c.b16 %v1891, %v1884
    %v2508 = vpack.c.b16 %v1892, %v1885
    %v2509 = vpack.c.b16 %v1900, %v1893
    %v2510 = vpack.c.b16 %v1901, %v1894
    %v2511 = vpack.c.b16 %v1902, %v1895
    %v2512 = vpack.c.b16 %v1903, %v1896
    %v2513 = vpack.c.b16 %v1904, %v1897
    %v2514 = vpack.c.b16 %v1905, %v1898
    %v2515 = vpack.c.b16 %v1906, %v1899
    %v2516 = vpack.c.b16 %v1914, %v1907
    %v2517 = vpack.c.b16 %v1915, %v1908
    %v2518 = vpack.c.b16 %v1916, %v1909
    %v2519 = vpack.c.b16 %v1917, %v1910
    %v2520 = vpack.c.b16 %v1918, %v1911
    %v2521 = vpack.c.b16 %v1919, %v1912
    %v2522 = vpack.c.b16 %v1920, %v1913
    %v2523 = vpack.c.b16 %v1928, %v1921
    %v2524 = vpack.c.b16 %v1929, %v1922
    %v2525 = vpack.c.b16 %v1930, %v1923
    %v2526 = vpack.c.b16 %v1931, %v1924
    %v2527 = vpack.c.b16 %v1932, %v1925
    %v2528 = vpack.c.b16 %v1933, %v1926
    %v2529 = vpack.c.b16 %v1934, %v1927
    %v2530 = vpack.c.b16 %v1942, %v1935
    %v2531 = vpack.c.b16 %v1943, %v1936
    %v2532 = vpack.c.b16 %v1944, %v1937
    %v2533 = vpack.c.b16 %v1945, %v1938
    %v2534 = vpack.c.b16 %v1946, %v1939
    %v2535 = vpack.c.b16 %v1947, %v1940
    %v2536 = vpack.c.b16 %v1948, %v1941
    %v2537 = vpack.c.b16 %v1956, %v1949
    %v2538 = vpack.c.b16 %v1957, %v1950
    %v2539 = vpack.c.b16 %v1958, %v1951
    %v2540 = vpack.c.b16 %v1959, %v1952
    %v2541 = vpack.c.b16 %v1960, %v1953
    %v2542 = vpack.c.b16 %v1961, %v1954
    %v2543 = vpack.c.b16 %v1962, %v1955
    %v2544 = vpack.c.b16 %v1970, %v1963
    %v2545 = vpack.c.b16 %v1971, %v1964
    %v2546 = vpack.c.b16 %v1972, %v1965
    %v2547 = vpack.c.b16 %v1973, %v1966
    %v2548 = vpack.c.b16 %v1974, %v1967
    %v2549 = vpack.c.b16 %v1975, %v1968
    %v2550 = vpack.c.b16 %v1976, %v1969
    %v2551 = vpack.c.b16 %v1984, %v1977
    %v2552 = vpack.c.b16 %v1985, %v1978
    %v2553 = vpack.c.b16 %v1986, %v1979
    %v2554 = vpack.c.b16 %v1987, %v1980
    %v2555 = vpack.c.b16 %v1988, %v1981
    %v2556 = vpack.c.b16 %v1989, %v1982
    %v2557 = vpack.c.b16 %v1990, %v1983
    %v2558 = vpack.c.b16 %v1998, %v1991
    %v2559 = vpack.c.b16 %v1999, %v1992
    %v2560 = vpack.c.b16 %v2000, %v1993
    %v2561 = vpack.c.b16 %v2001, %v1994
    %v2562 = vpack.c.b16 %v2002, %v1995
    %v2563 = vpack.c.b16 %v2003, %v1996
    %v2564 = vpack.c.b16 %v2004, %v1997
    %v2565 = vpack.c.b16 %v2012, %v2005
    %v2566 = vpack.c.b16 %v2013, %v2006
    %v2567 = vpack.c.b16 %v2014, %v2007
    %v2568 = vpack.c.b16 %v2015, %v2008
    %v2569 = vpack.c.b16 %v2016, %v2009
    %v2570 = vpack.c.b16 %v2017, %v2010
    %v2571 = vpack.c.b16 %v2018, %v2011
    %v2572 = vpack.c.b16 %v2026, %v2019
    %v2573 = vpack.c.b16 %v2027, %v2020
    %v2574 = vpack.c.b16 %v2028, %v2021
    %v2575 = vpack.c.b16 %v2029, %v2022
    %v2576 = vpack.c.b16 %v2030, %v2023
    %v2577 = vpack.c.b16 %v2031, %v2024
    %v2578 = vpack.c.b16 %v2032, %v2025
    %v2579 = vpack.c.b16 %v2040, %v2033
    %v2580 = vpack.c.b16 %v2041, %v2034
    %v2581 = vpack.c.b16 %v2042, %v2035
    %v2582 = vpack.c.b16 %v2043, %v2036
    %v2583 = vpack.c.b16 %v2044, %v2037
    %v2584 = vpack.c.b16 %v2045, %v2038
    %v2585 = vpack.c.b16 %v2046, %v2039
    %v2586 = vpack.c.b16 %v2054, %v2047
    %v2587 = vpack.c.b16 %v2055, %v2048
    %v2588 = vpack.c.b16 %v2056, %v2049
    %v2589 = vpack.c.b16 %v2057, %v2050
    %v2590 = vpack.c.b16 %v2058, %v2051
    %v2591 = vpack.c.b16 %v2059, %v2052
    %v2592 = vpack.c.b16 %v2060, %v2053
    %v2593 = vpack.c.b16 %v2068, %v2061
    %v2594 = vpack.c.b16 %v2069, %v2062
    %v2595 = vpack.c.b16 %v2070, %v2063
    %v2596 = vpack.c.b16 %v2071, %v2064
    %v2597 = vpack.c.b16 %v2072, %v2065
    %v2598 = vpack.c.b16 %v2073, %v2066
    %v2599 = vpack.c.b16 %v2074, %v2067
    %v2600 = vpack.c.b16 %v2082, %v2075
    %v2601 = vpack.c.b16 %v2083, %v2076
    %v2602 = vpack.c.b16 %v2084, %v2077
    %v2603 = vpack.c.b16 %v2085, %v2078
    %v2604 = vpack.c.b16 %v2086, %v2079
    %v2605 = vpack.c.b16 %v2087, %v2080
    %v2606 = vpack.c.b16 %v2088, %v2081
    %v2607 = vpack.c.b16 %v2096, %v2089
    %v2608 = vpack.c.b16 %v2097, %v2090
    %v2609 = vpack.c.b16 %v2098, %v2091
    %v2610 = vpack.c.b16 %v2099, %v2092
    %v2611 = vpack.c.b16 %v2100, %v2093
    %v2612 = vpack.c.b16 %v2101, %v2094
    %v2613 = vpack.c.b16 %v2102, %v2095
    %v2614 = vpack.c.b16 %v2110, %v2103
    %v2615 = vpack.c.b16 %v2111, %v2104
    %v2616 = vpack.c.b16 %v2112, %v2105
    %v2617 = vpack.c.b16 %v2113, %v2106
    %v2618 = vpack.c.b16 %v2114, %v2107
    %v2619 = vpack.c.b16 %v2115, %v2108
    %v2620 = vpack.c.b16 %v2116, %v2109
    %v2621 = vpack.c.b16 %v2124, %v2117
    %v2622 = vpack.c.b16 %v2125, %v2118
    %v2623 = vpack.c.b16 %v2126, %v2119
    %v2624 = vpack.c.b16 %v2127, %v2120
    %v2625 = vpack.c.b16 %v2128, %v2121
    %v2626 = vpack.c.b16 %v2129, %v2122
    %v2627 = vpack.c.b16 %v2130, %v2123
    %v2628 = vpack.c.b16 %v2138, %v2131
    %v2629 = vpack.c.b16 %v2139, %v2132
    %v2630 = vpack.c.b16 %v2140, %v2133
    %v2631 = vpack.c.b16 %v2141, %v2134
    %v2632 = vpack.c.b16 %v2142, %v2135
    %v2633 = vpack.c.b16 %v2143, %v2136
    %v2634 = vpack.c.b16 %v2144, %v2137
    %v2635 = vpack.c.b16 %v2152, %v2145
    %v2636 = vpack.c.b16 %v2153, %v2146
    %v2637 = vpack.c.b16 %v2154, %v2147
    %v2638 = vpack.c.b16 %v2155, %v2148
    %v2639 = vpack.c.b16 %v2156, %v2149
    %v2640 = vpack.c.b16 %v2157, %v2150
    %v2641 = vpack.c.b16 %v2158, %v2151
    %v2642 = vpack.c.b16 %v2166, %v2159
    %v2643 = vpack.c.b16 %v2167, %v2160
    %v2644 = vpack.c.b16 %v2168, %v2161
    %v2645 = vpack.c.b16 %v2169, %v2162
    %v2646 = vpack.c.b16 %v2170, %v2163
    %v2647 = vpack.c.b16 %v2171, %v2164
    %v2648 = vpack.c.b16 %v2172, %v2165
    %v2649 = vpack.c.b16 %v2180, %v2173
    %v2650 = vpack.c.b16 %v2181, %v2174
    %v2651 = vpack.c.b16 %v2182, %v2175
    %v2652 = vpack.c.b16 %v2183, %v2176
    %v2653 = vpack.c.b16 %v2184, %v2177
    %v2654 = vpack.c.b16 %v2185, %v2178
    %v2655 = vpack.c.b16 %v2186, %v2179
    %v2656 = vpack.c.b16 %v2194, %v2187
    %v2657 = vpack.c.b16 %v2195, %v2188
    %v2658 = vpack.c.b16 %v2196, %v2189
    %v2659 = vpack.c.b16 %v2197, %v2190
    %v2660 = vpack.c.b16 %v2198, %v2191
    %v2661 = vpack.c.b16 %v2199, %v2192
    %v2662 = vpack.c.b16 %v2200, %v2193
    %v2663 = vpack.c.b16 %v2208, %v2201
    %v2664 = vpack.c.b16 %v2209, %v2202
    %v2665 = vpack.c.b16 %v2210, %v2203
    %v2666 = vpack.c.b16 %v2211, %v2204
    %v2667 = vpack.c.b16 %v2212, %v2205
    %v2668 = vpack.c.b16 %v2213, %v2206
    %v2669 = vpack.c.b16 %v2214, %v2207
    %v2670 = vpack.c.b16 %v2222, %v2215
    %v2671 = vpack.c.b16 %v2223, %v2216
    %v2672 = vpack.c.b16 %v2224, %v2217
    %v2673 = vpack.c.b16 %v2225, %v2218
    %v2674 = vpack.c.b16 %v2226, %v2219
    %v2675 = vpack.c.b16 %v2227, %v2220
    %v2676 = vpack.c.b16 %v2228, %v2221
    %3125 = vmatpush.bf16.msra.mxu0 %v2278
    %3126 = vmatpush.bf16.msra.mxu0 %v2271
    %3127 = vmatpush.bf16.msra.mxu0 %v2264
    %3128 = vmatpush.bf16.msra.mxu0 %v2257
    %3129 = vmatpush.bf16.msra.mxu0 %v2250
    %3130 = vmatpush.bf16.msra.mxu0 %v2243
    %3131 = vmatpush.bf16.msra.mxu0 %v2236
    %3132 = vmatpush.bf16.msra.mxu0 %v2229
    %3133 = vmatmul.bf16.gmra.mxu0 %v285
    %v3134 = vpop.f32.mrf.mxu0
    %v3135 = vadd.f32 %v807, %v3134
    %v3136 = vpop.f32.mrf.mxu0
    %3137 = vdwg.mxu0
    %3138 = vmatpush.bf16.msra.mxu0 %v2334
    %3139 = vmatpush.bf16.msra.mxu0 %v2327
    %3140 = vmatpush.bf16.msra.mxu0 %v2320
    %3141 = vmatpush.bf16.msra.mxu0 %v2313
    %3142 = vmatpush.bf16.msra.mxu0 %v2306
    %3143 = vmatpush.bf16.msra.mxu0 %v2299
    %3144 = vmatpush.bf16.msra.mxu0 %v2292
    %3145 = vmatpush.bf16.msra.mxu0 %v2285
    %3146 = vmatmul.bf16.gmra.mxu0 %v286
    %v3147 = vpop.f32.mrf.mxu0
    %v3148 = vadd.f32 %v3135, %v3147
    %v3149 = vpop.f32.mrf.mxu0
    %3150 = vdwg.mxu0
    %3151 = vmatpush.bf16.msra.mxu0 %v2390
    %3152 = vmatpush.bf16.msra.mxu0 %v2383
    %3153 = vmatpush.bf16.msra.mxu0 %v2376
    %3154 = vmatpush.bf16.msra.mxu0 %v2369
    %3155 = vmatpush.bf16.msra.mxu0 %v2362
    %3156 = vmatpush.bf16.msra.mxu0 %v2355
    %3157 = vmatpush.bf16.msra.mxu0 %v2348
    %3158 = vmatpush.bf16.msra.mxu0 %v2341
    %3159 = vmatmul.bf16.gmra.mxu0 %v287
    %v3160 = vpop.f32.mrf.mxu0
    %v3161 = vadd.f32 %v3148, %v3160
    %v3162 = vpop.f32.mrf.mxu0
    %3163 = vdwg.mxu0
    %3164 = vmatpush.bf16.msra.mxu0 %v2446
    %3165 = vmatpush.bf16.msra.mxu0 %v2439
    %3166 = vmatpush.bf16.msra.mxu0 %v2432
    %3167 = vmatpush.bf16.msra.mxu0 %v2425
    %3168 = vmatpush.bf16.msra.mxu0 %v2418
    %3169 = vmatpush.bf16.msra.mxu0 %v2411
    %3170 = vmatpush.bf16.msra.mxu0 %v2404
    %3171 = vmatpush.bf16.msra.mxu0 %v2397
    %3172 = vmatmul.bf16.gmra.mxu0 %v288
    %v3173 = vpop.f32.mrf.mxu0
    %v3174 = vadd.f32 %v3161, %v3173
    %v3175 = vpop.f32.mrf.mxu0
    %3176 = vdwg.mxu0
    %3177 = vmatpush.bf16.msra.mxu0 %v2502
    %3178 = vmatpush.bf16.msra.mxu0 %v2495
    %3179 = vmatpush.bf16.msra.mxu0 %v2488
    %3180 = vmatpush.bf16.msra.mxu0 %v2481
    %3181 = vmatpush.bf16.msra.mxu0 %v2474
    %3182 = vmatpush.bf16.msra.mxu0 %v2467
    %3183 = vmatpush.bf16.msra.mxu0 %v2460
    %3184 = vmatpush.bf16.msra.mxu0 %v2453
    %3185 = vmatmul.bf16.gmra.mxu0 %v289
    %v3186 = vpop.f32.mrf.mxu0
    %v3187 = vadd.f32 %v3174, %v3186
    %v3188 = vpop.f32.mrf.mxu0
    %3189 = vdwg.mxu0
    %3190 = vmatpush.bf16.msra.mxu0 %v2558
    %3191 = vmatpush.bf16.msra.mxu0 %v2551
    %3192 = vmatpush.bf16.msra.mxu0 %v2544
    %3193 = vmatpush.bf16.msra.mxu0 %v2537
    %3194 = vmatpush.bf16.msra.mxu0 %v2530
    %3195 = vmatpush.bf16.msra.mxu0 %v2523
    %3196 = vmatpush.bf16.msra.mxu0 %v2516
    %3197 = vmatpush.bf16.msra.mxu0 %v2509
    %3198 = vmatmul.bf16.gmra.mxu0 %v290
    %v3199 = vpop.f32.mrf.mxu0
    %v3200 = vadd.f32 %v3187, %v3199
    %v3201 = vpop.f32.mrf.mxu0
    %3202 = vdwg.mxu0
    %3203 = vmatpush.bf16.msra.mxu0 %v2614
    %3204 = vmatpush.bf16.msra.mxu0 %v2607
    %3205 = vmatpush.bf16.msra.mxu0 %v2600
    %3206 = vmatpush.bf16.msra.mxu0 %v2593
    %3207 = vmatpush.bf16.msra.mxu0 %v2586
    %3208 = vmatpush.bf16.msra.mxu0 %v2579
    %3209 = vmatpush.bf16.msra.mxu0 %v2572
    %3210 = vmatpush.bf16.msra.mxu0 %v2565
    %3211 = vmatmul.bf16.gmra.mxu0 %v291
    %v3212 = vpop.f32.mrf.mxu0
    %v3213 = vadd.f32 %v3200, %v3212
    %v3214 = vpop.f32.mrf.mxu0
    %3215 = vdwg.mxu0
    %3216 = vmatpush.bf16.msra.mxu0 %v2670
    %3217 = vmatpush.bf16.msra.mxu0 %v2663
    %3218 = vmatpush.bf16.msra.mxu0 %v2656
    %3219 = vmatpush.bf16.msra.mxu0 %v2649
    %3220 = vmatpush.bf16.msra.mxu0 %v2642
    %3221 = vmatpush.bf16.msra.mxu0 %v2635
    %3222 = vmatpush.bf16.msra.mxu0 %v2628
    %3223 = vmatpush.bf16.msra.mxu0 %v2621
    %3224 = vmatmul.bf16.gmra.mxu0 %v292
    %v3225 = vpop.f32.mrf.mxu0
    %v3226 = vadd.f32 %v3213, %v3225
    %v3227 = vpop.f32.mrf.mxu0
    %3228 = vdwg.mxu0
    %3229 = vmatpush.bf16.msra.mxu0 %v2279
    %3230 = vmatpush.bf16.msra.mxu0 %v2272
    %3231 = vmatpush.bf16.msra.mxu0 %v2265
    %3232 = vmatpush.bf16.msra.mxu0 %v2258
    %3233 = vmatpush.bf16.msra.mxu0 %v2251
    %3234 = vmatpush.bf16.msra.mxu0 %v2244
    %3235 = vmatpush.bf16.msra.mxu0 %v2237
    %3236 = vmatpush.bf16.msra.mxu0 %v2230
    %3237 = vmatmul.bf16.gmra.mxu0 %v285
    %v3238 = vpop.f32.mrf.mxu0
    %v3239 = vadd.f32 %v808, %v3238
    %v3240 = vpop.f32.mrf.mxu0
    %3241 = vdwg.mxu0
    %3242 = vmatpush.bf16.msra.mxu0 %v2335
    %3243 = vmatpush.bf16.msra.mxu0 %v2328
    %3244 = vmatpush.bf16.msra.mxu0 %v2321
    %3245 = vmatpush.bf16.msra.mxu0 %v2314
    %3246 = vmatpush.bf16.msra.mxu0 %v2307
    %3247 = vmatpush.bf16.msra.mxu0 %v2300
    %3248 = vmatpush.bf16.msra.mxu0 %v2293
    %3249 = vmatpush.bf16.msra.mxu0 %v2286
    %3250 = vmatmul.bf16.gmra.mxu0 %v286
    %v3251 = vpop.f32.mrf.mxu0
    %v3252 = vadd.f32 %v3239, %v3251
    %v3253 = vpop.f32.mrf.mxu0
    %3254 = vdwg.mxu0
    %3255 = vmatpush.bf16.msra.mxu0 %v2391
    %3256 = vmatpush.bf16.msra.mxu0 %v2384
    %3257 = vmatpush.bf16.msra.mxu0 %v2377
    %3258 = vmatpush.bf16.msra.mxu0 %v2370
    %3259 = vmatpush.bf16.msra.mxu0 %v2363
    %3260 = vmatpush.bf16.msra.mxu0 %v2356
    %3261 = vmatpush.bf16.msra.mxu0 %v2349
    %3262 = vmatpush.bf16.msra.mxu0 %v2342
    %3263 = vmatmul.bf16.gmra.mxu0 %v287
    %v3264 = vpop.f32.mrf.mxu0
    %v3265 = vadd.f32 %v3252, %v3264
    %v3266 = vpop.f32.mrf.mxu0
    %3267 = vdwg.mxu0
    %3268 = vmatpush.bf16.msra.mxu0 %v2447
    %3269 = vmatpush.bf16.msra.mxu0 %v2440
    %3270 = vmatpush.bf16.msra.mxu0 %v2433
    %3271 = vmatpush.bf16.msra.mxu0 %v2426
    %3272 = vmatpush.bf16.msra.mxu0 %v2419
    %3273 = vmatpush.bf16.msra.mxu0 %v2412
    %3274 = vmatpush.bf16.msra.mxu0 %v2405
    %3275 = vmatpush.bf16.msra.mxu0 %v2398
    %3276 = vmatmul.bf16.gmra.mxu0 %v288
    %v3277 = vpop.f32.mrf.mxu0
    %v3278 = vadd.f32 %v3265, %v3277
    %v3279 = vpop.f32.mrf.mxu0
    %3280 = vdwg.mxu0
    %3281 = vmatpush.bf16.msra.mxu0 %v2503
    %3282 = vmatpush.bf16.msra.mxu0 %v2496
    %3283 = vmatpush.bf16.msra.mxu0 %v2489
    %3284 = vmatpush.bf16.msra.mxu0 %v2482
    %3285 = vmatpush.bf16.msra.mxu0 %v2475
    %3286 = vmatpush.bf16.msra.mxu0 %v2468
    %3287 = vmatpush.bf16.msra.mxu0 %v2461
    %3288 = vmatpush.bf16.msra.mxu0 %v2454
    %3289 = vmatmul.bf16.gmra.mxu0 %v289
    %v3290 = vpop.f32.mrf.mxu0
    %v3291 = vadd.f32 %v3278, %v3290
    %v3292 = vpop.f32.mrf.mxu0
    %3293 = vdwg.mxu0
    %3294 = vmatpush.bf16.msra.mxu0 %v2559
    %3295 = vmatpush.bf16.msra.mxu0 %v2552
    %3296 = vmatpush.bf16.msra.mxu0 %v2545
    %3297 = vmatpush.bf16.msra.mxu0 %v2538
    %3298 = vmatpush.bf16.msra.mxu0 %v2531
    %3299 = vmatpush.bf16.msra.mxu0 %v2524
    %3300 = vmatpush.bf16.msra.mxu0 %v2517
    %3301 = vmatpush.bf16.msra.mxu0 %v2510
    %3302 = vmatmul.bf16.gmra.mxu0 %v290
    %v3303 = vpop.f32.mrf.mxu0
    %v3304 = vadd.f32 %v3291, %v3303
    %v3305 = vpop.f32.mrf.mxu0
    %3306 = vdwg.mxu0
    %3307 = vmatpush.bf16.msra.mxu0 %v2615
    %3308 = vmatpush.bf16.msra.mxu0 %v2608
    %3309 = vmatpush.bf16.msra.mxu0 %v2601
    %3310 = vmatpush.bf16.msra.mxu0 %v2594
    %3311 = vmatpush.bf16.msra.mxu0 %v2587
    %3312 = vmatpush.bf16.msra.mxu0 %v2580
    %3313 = vmatpush.bf16.msra.mxu0 %v2573
    %3314 = vmatpush.bf16.msra.mxu0 %v2566
    %3315 = vmatmul.bf16.gmra.mxu0 %v291
    %v3316 = vpop.f32.mrf.mxu0
    %v3317 = vadd.f32 %v3304, %v3316
    %v3318 = vpop.f32.mrf.mxu0
    %3319 = vdwg.mxu0
    %3320 = vmatpush.bf16.msra.mxu0 %v2671
    %3321 = vmatpush.bf16.msra.mxu0 %v2664
    %3322 = vmatpush.bf16.msra.mxu0 %v2657
    %3323 = vmatpush.bf16.msra.mxu0 %v2650
    %3324 = vmatpush.bf16.msra.mxu0 %v2643
    %3325 = vmatpush.bf16.msra.mxu0 %v2636
    %3326 = vmatpush.bf16.msra.mxu0 %v2629
    %3327 = vmatpush.bf16.msra.mxu0 %v2622
    %3328 = vmatmul.bf16.gmra.mxu0 %v292
    %v3329 = vpop.f32.mrf.mxu0
    %v3330 = vadd.f32 %v3317, %v3329
    %v3331 = vpop.f32.mrf.mxu0
    %3332 = vdwg.mxu0
    %3333 = vmatpush.bf16.msra.mxu0 %v2280
    %3334 = vmatpush.bf16.msra.mxu0 %v2273
    %3335 = vmatpush.bf16.msra.mxu0 %v2266
    %3336 = vmatpush.bf16.msra.mxu0 %v2259
    %3337 = vmatpush.bf16.msra.mxu0 %v2252
    %3338 = vmatpush.bf16.msra.mxu0 %v2245
    %3339 = vmatpush.bf16.msra.mxu0 %v2238
    %3340 = vmatpush.bf16.msra.mxu0 %v2231
    %3341 = vmatmul.bf16.gmra.mxu0 %v285
    %v3342 = vpop.f32.mrf.mxu0
    %v3343 = vadd.f32 %v809, %v3342
    %v3344 = vpop.f32.mrf.mxu0
    %3345 = vdwg.mxu0
    %3346 = vmatpush.bf16.msra.mxu0 %v2336
    %3347 = vmatpush.bf16.msra.mxu0 %v2329
    %3348 = vmatpush.bf16.msra.mxu0 %v2322
    %3349 = vmatpush.bf16.msra.mxu0 %v2315
    %3350 = vmatpush.bf16.msra.mxu0 %v2308
    %3351 = vmatpush.bf16.msra.mxu0 %v2301
    %3352 = vmatpush.bf16.msra.mxu0 %v2294
    %3353 = vmatpush.bf16.msra.mxu0 %v2287
    %3354 = vmatmul.bf16.gmra.mxu0 %v286
    %v3355 = vpop.f32.mrf.mxu0
    %v3356 = vadd.f32 %v3343, %v3355
    %v3357 = vpop.f32.mrf.mxu0
    %3358 = vdwg.mxu0
    %3359 = vmatpush.bf16.msra.mxu0 %v2392
    %3360 = vmatpush.bf16.msra.mxu0 %v2385
    %3361 = vmatpush.bf16.msra.mxu0 %v2378
    %3362 = vmatpush.bf16.msra.mxu0 %v2371
    %3363 = vmatpush.bf16.msra.mxu0 %v2364
    %3364 = vmatpush.bf16.msra.mxu0 %v2357
    %3365 = vmatpush.bf16.msra.mxu0 %v2350
    %3366 = vmatpush.bf16.msra.mxu0 %v2343
    %3367 = vmatmul.bf16.gmra.mxu0 %v287
    %v3368 = vpop.f32.mrf.mxu0
    %v3369 = vadd.f32 %v3356, %v3368
    %v3370 = vpop.f32.mrf.mxu0
    %3371 = vdwg.mxu0
    %3372 = vmatpush.bf16.msra.mxu0 %v2448
    %3373 = vmatpush.bf16.msra.mxu0 %v2441
    %3374 = vmatpush.bf16.msra.mxu0 %v2434
    %3375 = vmatpush.bf16.msra.mxu0 %v2427
    %3376 = vmatpush.bf16.msra.mxu0 %v2420
    %3377 = vmatpush.bf16.msra.mxu0 %v2413
    %3378 = vmatpush.bf16.msra.mxu0 %v2406
    %3379 = vmatpush.bf16.msra.mxu0 %v2399
    %3380 = vmatmul.bf16.gmra.mxu0 %v288
    %v3381 = vpop.f32.mrf.mxu0
    %v3382 = vadd.f32 %v3369, %v3381
    %v3383 = vpop.f32.mrf.mxu0
    %3384 = vdwg.mxu0
    %3385 = vmatpush.bf16.msra.mxu0 %v2504
    %3386 = vmatpush.bf16.msra.mxu0 %v2497
    %3387 = vmatpush.bf16.msra.mxu0 %v2490
    %3388 = vmatpush.bf16.msra.mxu0 %v2483
    %3389 = vmatpush.bf16.msra.mxu0 %v2476
    %3390 = vmatpush.bf16.msra.mxu0 %v2469
    %3391 = vmatpush.bf16.msra.mxu0 %v2462
    %3392 = vmatpush.bf16.msra.mxu0 %v2455
    %3393 = vmatmul.bf16.gmra.mxu0 %v289
    %v3394 = vpop.f32.mrf.mxu0
    %v3395 = vadd.f32 %v3382, %v3394
    %v3396 = vpop.f32.mrf.mxu0
    %3397 = vdwg.mxu0
    %3398 = vmatpush.bf16.msra.mxu0 %v2560
    %3399 = vmatpush.bf16.msra.mxu0 %v2553
    %3400 = vmatpush.bf16.msra.mxu0 %v2546
    %3401 = vmatpush.bf16.msra.mxu0 %v2539
    %3402 = vmatpush.bf16.msra.mxu0 %v2532
    %3403 = vmatpush.bf16.msra.mxu0 %v2525
    %3404 = vmatpush.bf16.msra.mxu0 %v2518
    %3405 = vmatpush.bf16.msra.mxu0 %v2511
    %3406 = vmatmul.bf16.gmra.mxu0 %v290
    %v3407 = vpop.f32.mrf.mxu0
    %v3408 = vadd.f32 %v3395, %v3407
    %v3409 = vpop.f32.mrf.mxu0
    %3410 = vdwg.mxu0
    %3411 = vmatpush.bf16.msra.mxu0 %v2616
    %3412 = vmatpush.bf16.msra.mxu0 %v2609
    %3413 = vmatpush.bf16.msra.mxu0 %v2602
    %3414 = vmatpush.bf16.msra.mxu0 %v2595
    %3415 = vmatpush.bf16.msra.mxu0 %v2588
    %3416 = vmatpush.bf16.msra.mxu0 %v2581
    %3417 = vmatpush.bf16.msra.mxu0 %v2574
    %3418 = vmatpush.bf16.msra.mxu0 %v2567
    %3419 = vmatmul.bf16.gmra.mxu0 %v291
    %v3420 = vpop.f32.mrf.mxu0
    %v3421 = vadd.f32 %v3408, %v3420
    %v3422 = vpop.f32.mrf.mxu0
    %3423 = vdwg.mxu0
    %3424 = vmatpush.bf16.msra.mxu0 %v2672
    %3425 = vmatpush.bf16.msra.mxu0 %v2665
    %3426 = vmatpush.bf16.msra.mxu0 %v2658
    %3427 = vmatpush.bf16.msra.mxu0 %v2651
    %3428 = vmatpush.bf16.msra.mxu0 %v2644
    %3429 = vmatpush.bf16.msra.mxu0 %v2637
    %3430 = vmatpush.bf16.msra.mxu0 %v2630
    %3431 = vmatpush.bf16.msra.mxu0 %v2623
    %3432 = vmatmul.bf16.gmra.mxu0 %v292
    %v3433 = vpop.f32.mrf.mxu0
    %v3434 = vadd.f32 %v3421, %v3433
    %v3435 = vpop.f32.mrf.mxu0
    %3436 = vdwg.mxu0
    %3437 = vmatpush.bf16.msra.mxu0 %v2281
    %3438 = vmatpush.bf16.msra.mxu0 %v2274
    %3439 = vmatpush.bf16.msra.mxu0 %v2267
    %3440 = vmatpush.bf16.msra.mxu0 %v2260
    %3441 = vmatpush.bf16.msra.mxu0 %v2253
    %3442 = vmatpush.bf16.msra.mxu0 %v2246
    %3443 = vmatpush.bf16.msra.mxu0 %v2239
    %3444 = vmatpush.bf16.msra.mxu0 %v2232
    %3445 = vmatmul.bf16.gmra.mxu0 %v285
    %v3446 = vpop.f32.mrf.mxu0
    %v3447 = vadd.f32 %v810, %v3446
    %v3448 = vpop.f32.mrf.mxu0
    %3449 = vdwg.mxu0
    %3450 = vmatpush.bf16.msra.mxu0 %v2337
    %3451 = vmatpush.bf16.msra.mxu0 %v2330
    %3452 = vmatpush.bf16.msra.mxu0 %v2323
    %3453 = vmatpush.bf16.msra.mxu0 %v2316
    %3454 = vmatpush.bf16.msra.mxu0 %v2309
    %3455 = vmatpush.bf16.msra.mxu0 %v2302
    %3456 = vmatpush.bf16.msra.mxu0 %v2295
    %3457 = vmatpush.bf16.msra.mxu0 %v2288
    %3458 = vmatmul.bf16.gmra.mxu0 %v286
    %v3459 = vpop.f32.mrf.mxu0
    %v3460 = vadd.f32 %v3447, %v3459
    %v3461 = vpop.f32.mrf.mxu0
    %3462 = vdwg.mxu0
    %3463 = vmatpush.bf16.msra.mxu0 %v2393
    %3464 = vmatpush.bf16.msra.mxu0 %v2386
    %3465 = vmatpush.bf16.msra.mxu0 %v2379
    %3466 = vmatpush.bf16.msra.mxu0 %v2372
    %3467 = vmatpush.bf16.msra.mxu0 %v2365
    %3468 = vmatpush.bf16.msra.mxu0 %v2358
    %3469 = vmatpush.bf16.msra.mxu0 %v2351
    %3470 = vmatpush.bf16.msra.mxu0 %v2344
    %3471 = vmatmul.bf16.gmra.mxu0 %v287
    %v3472 = vpop.f32.mrf.mxu0
    %v3473 = vadd.f32 %v3460, %v3472
    %v3474 = vpop.f32.mrf.mxu0
    %3475 = vdwg.mxu0
    %3476 = vmatpush.bf16.msra.mxu0 %v2449
    %3477 = vmatpush.bf16.msra.mxu0 %v2442
    %3478 = vmatpush.bf16.msra.mxu0 %v2435
    %3479 = vmatpush.bf16.msra.mxu0 %v2428
    %3480 = vmatpush.bf16.msra.mxu0 %v2421
    %3481 = vmatpush.bf16.msra.mxu0 %v2414
    %3482 = vmatpush.bf16.msra.mxu0 %v2407
    %3483 = vmatpush.bf16.msra.mxu0 %v2400
    %3484 = vmatmul.bf16.gmra.mxu0 %v288
    %v3485 = vpop.f32.mrf.mxu0
    %v3486 = vadd.f32 %v3473, %v3485
    %v3487 = vpop.f32.mrf.mxu0
    %3488 = vdwg.mxu0
    %3489 = vmatpush.bf16.msra.mxu0 %v2505
    %3490 = vmatpush.bf16.msra.mxu0 %v2498
    %3491 = vmatpush.bf16.msra.mxu0 %v2491
    %3492 = vmatpush.bf16.msra.mxu0 %v2484
    %3493 = vmatpush.bf16.msra.mxu0 %v2477
    %3494 = vmatpush.bf16.msra.mxu0 %v2470
    %3495 = vmatpush.bf16.msra.mxu0 %v2463
    %3496 = vmatpush.bf16.msra.mxu0 %v2456
    %3497 = vmatmul.bf16.gmra.mxu0 %v289
    %v3498 = vpop.f32.mrf.mxu0
    %v3499 = vadd.f32 %v3486, %v3498
    %v3500 = vpop.f32.mrf.mxu0
    %3501 = vdwg.mxu0
    %3502 = vmatpush.bf16.msra.mxu0 %v2561
    %3503 = vmatpush.bf16.msra.mxu0 %v2554
    %3504 = vmatpush.bf16.msra.mxu0 %v2547
    %3505 = vmatpush.bf16.msra.mxu0 %v2540
    %3506 = vmatpush.bf16.msra.mxu0 %v2533
    %3507 = vmatpush.bf16.msra.mxu0 %v2526
    %3508 = vmatpush.bf16.msra.mxu0 %v2519
    %3509 = vmatpush.bf16.msra.mxu0 %v2512
    %3510 = vmatmul.bf16.gmra.mxu0 %v290
    %v3511 = vpop.f32.mrf.mxu0
    %v3512 = vadd.f32 %v3499, %v3511
    %v3513 = vpop.f32.mrf.mxu0
    %3514 = vdwg.mxu0
    %3515 = vmatpush.bf16.msra.mxu0 %v2617
    %3516 = vmatpush.bf16.msra.mxu0 %v2610
    %3517 = vmatpush.bf16.msra.mxu0 %v2603
    %3518 = vmatpush.bf16.msra.mxu0 %v2596
    %3519 = vmatpush.bf16.msra.mxu0 %v2589
    %3520 = vmatpush.bf16.msra.mxu0 %v2582
    %3521 = vmatpush.bf16.msra.mxu0 %v2575
    %3522 = vmatpush.bf16.msra.mxu0 %v2568
    %3523 = vmatmul.bf16.gmra.mxu0 %v291
    %v3524 = vpop.f32.mrf.mxu0
    %v3525 = vadd.f32 %v3512, %v3524
    %v3526 = vpop.f32.mrf.mxu0
    %3527 = vdwg.mxu0
    %3528 = vmatpush.bf16.msra.mxu0 %v2673
    %3529 = vmatpush.bf16.msra.mxu0 %v2666
    %3530 = vmatpush.bf16.msra.mxu0 %v2659
    %3531 = vmatpush.bf16.msra.mxu0 %v2652
    %3532 = vmatpush.bf16.msra.mxu0 %v2645
    %3533 = vmatpush.bf16.msra.mxu0 %v2638
    %3534 = vmatpush.bf16.msra.mxu0 %v2631
    %3535 = vmatpush.bf16.msra.mxu0 %v2624
    %3536 = vmatmul.bf16.gmra.mxu0 %v292
    %v3537 = vpop.f32.mrf.mxu0
    %v3538 = vadd.f32 %v3525, %v3537
    %v3539 = vpop.f32.mrf.mxu0
    %3540 = vdwg.mxu0
    %3541 = vmatpush.bf16.msra.mxu0 %v2282
    %3542 = vmatpush.bf16.msra.mxu0 %v2275
    %3543 = vmatpush.bf16.msra.mxu0 %v2268
    %3544 = vmatpush.bf16.msra.mxu0 %v2261
    %3545 = vmatpush.bf16.msra.mxu0 %v2254
    %3546 = vmatpush.bf16.msra.mxu0 %v2247
    %3547 = vmatpush.bf16.msra.mxu0 %v2240
    %3548 = vmatpush.bf16.msra.mxu0 %v2233
    %3549 = vmatmul.bf16.gmra.mxu0 %v285
    %v3550 = vpop.f32.mrf.mxu0
    %v3551 = vadd.f32 %v811, %v3550
    %v3552 = vpop.f32.mrf.mxu0
    %3553 = vdwg.mxu0
    %3554 = vmatpush.bf16.msra.mxu0 %v2338
    %3555 = vmatpush.bf16.msra.mxu0 %v2331
    %3556 = vmatpush.bf16.msra.mxu0 %v2324
    %3557 = vmatpush.bf16.msra.mxu0 %v2317
    %3558 = vmatpush.bf16.msra.mxu0 %v2310
    %3559 = vmatpush.bf16.msra.mxu0 %v2303
    %3560 = vmatpush.bf16.msra.mxu0 %v2296
    %3561 = vmatpush.bf16.msra.mxu0 %v2289
    %3562 = vmatmul.bf16.gmra.mxu0 %v286
    %v3563 = vpop.f32.mrf.mxu0
    %v3564 = vadd.f32 %v3551, %v3563
    %v3565 = vpop.f32.mrf.mxu0
    %3566 = vdwg.mxu0
    %3567 = vmatpush.bf16.msra.mxu0 %v2394
    %3568 = vmatpush.bf16.msra.mxu0 %v2387
    %3569 = vmatpush.bf16.msra.mxu0 %v2380
    %3570 = vmatpush.bf16.msra.mxu0 %v2373
    %3571 = vmatpush.bf16.msra.mxu0 %v2366
    %3572 = vmatpush.bf16.msra.mxu0 %v2359
    %3573 = vmatpush.bf16.msra.mxu0 %v2352
    %3574 = vmatpush.bf16.msra.mxu0 %v2345
    %3575 = vmatmul.bf16.gmra.mxu0 %v287
    %v3576 = vpop.f32.mrf.mxu0
    %v3577 = vadd.f32 %v3564, %v3576
    %v3578 = vpop.f32.mrf.mxu0
    %3579 = vdwg.mxu0
    %3580 = vmatpush.bf16.msra.mxu0 %v2450
    %3581 = vmatpush.bf16.msra.mxu0 %v2443
    %3582 = vmatpush.bf16.msra.mxu0 %v2436
    %3583 = vmatpush.bf16.msra.mxu0 %v2429
    %3584 = vmatpush.bf16.msra.mxu0 %v2422
    %3585 = vmatpush.bf16.msra.mxu0 %v2415
    %3586 = vmatpush.bf16.msra.mxu0 %v2408
    %3587 = vmatpush.bf16.msra.mxu0 %v2401
    %3588 = vmatmul.bf16.gmra.mxu0 %v288
    %v3589 = vpop.f32.mrf.mxu0
    %v3590 = vadd.f32 %v3577, %v3589
    %v3591 = vpop.f32.mrf.mxu0
    %3592 = vdwg.mxu0
    %3593 = vmatpush.bf16.msra.mxu0 %v2506
    %3594 = vmatpush.bf16.msra.mxu0 %v2499
    %3595 = vmatpush.bf16.msra.mxu0 %v2492
    %3596 = vmatpush.bf16.msra.mxu0 %v2485
    %3597 = vmatpush.bf16.msra.mxu0 %v2478
    %3598 = vmatpush.bf16.msra.mxu0 %v2471
    %3599 = vmatpush.bf16.msra.mxu0 %v2464
    %3600 = vmatpush.bf16.msra.mxu0 %v2457
    %3601 = vmatmul.bf16.gmra.mxu0 %v289
    %v3602 = vpop.f32.mrf.mxu0
    %v3603 = vadd.f32 %v3590, %v3602
    %v3604 = vpop.f32.mrf.mxu0
    %3605 = vdwg.mxu0
    %3606 = vmatpush.bf16.msra.mxu0 %v2562
    %3607 = vmatpush.bf16.msra.mxu0 %v2555
    %3608 = vmatpush.bf16.msra.mxu0 %v2548
    %3609 = vmatpush.bf16.msra.mxu0 %v2541
    %3610 = vmatpush.bf16.msra.mxu0 %v2534
    %3611 = vmatpush.bf16.msra.mxu0 %v2527
    %3612 = vmatpush.bf16.msra.mxu0 %v2520
    %3613 = vmatpush.bf16.msra.mxu0 %v2513
    %3614 = vmatmul.bf16.gmra.mxu0 %v290
    %v3615 = vpop.f32.mrf.mxu0
    %v3616 = vadd.f32 %v3603, %v3615
    %v3617 = vpop.f32.mrf.mxu0
    %3618 = vdwg.mxu0
    %3619 = vmatpush.bf16.msra.mxu0 %v2618
    %3620 = vmatpush.bf16.msra.mxu0 %v2611
    %3621 = vmatpush.bf16.msra.mxu0 %v2604
    %3622 = vmatpush.bf16.msra.mxu0 %v2597
    %3623 = vmatpush.bf16.msra.mxu0 %v2590
    %3624 = vmatpush.bf16.msra.mxu0 %v2583
    %3625 = vmatpush.bf16.msra.mxu0 %v2576
    %3626 = vmatpush.bf16.msra.mxu0 %v2569
    %3627 = vmatmul.bf16.gmra.mxu0 %v291
    %v3628 = vpop.f32.mrf.mxu0
    %v3629 = vadd.f32 %v3616, %v3628
    %v3630 = vpop.f32.mrf.mxu0
    %3631 = vdwg.mxu0
    %3632 = vmatpush.bf16.msra.mxu0 %v2674
    %3633 = vmatpush.bf16.msra.mxu0 %v2667
    %3634 = vmatpush.bf16.msra.mxu0 %v2660
    %3635 = vmatpush.bf16.msra.mxu0 %v2653
    %3636 = vmatpush.bf16.msra.mxu0 %v2646
    %3637 = vmatpush.bf16.msra.mxu0 %v2639
    %3638 = vmatpush.bf16.msra.mxu0 %v2632
    %3639 = vmatpush.bf16.msra.mxu0 %v2625
    %3640 = vmatmul.bf16.gmra.mxu0 %v292
    %v3641 = vpop.f32.mrf.mxu0
    %v3642 = vadd.f32 %v3629, %v3641
    %v3643 = vpop.f32.mrf.mxu0
    %3644 = vdwg.mxu0
    %3645 = vmatpush.bf16.msra.mxu0 %v2283
    %3646 = vmatpush.bf16.msra.mxu0 %v2276
    %3647 = vmatpush.bf16.msra.mxu0 %v2269
    %3648 = vmatpush.bf16.msra.mxu0 %v2262
    %3649 = vmatpush.bf16.msra.mxu0 %v2255
    %3650 = vmatpush.bf16.msra.mxu0 %v2248
    %3651 = vmatpush.bf16.msra.mxu0 %v2241
    %3652 = vmatpush.bf16.msra.mxu0 %v2234
    %3653 = vmatmul.bf16.gmra.mxu0 %v285
    %v3654 = vpop.f32.mrf.mxu0
    %v3655 = vadd.f32 %v812, %v3654
    %v3656 = vpop.f32.mrf.mxu0
    %3657 = vdwg.mxu0
    %3658 = vmatpush.bf16.msra.mxu0 %v2339
    %3659 = vmatpush.bf16.msra.mxu0 %v2332
    %3660 = vmatpush.bf16.msra.mxu0 %v2325
    %3661 = vmatpush.bf16.msra.mxu0 %v2318
    %3662 = vmatpush.bf16.msra.mxu0 %v2311
    %3663 = vmatpush.bf16.msra.mxu0 %v2304
    %3664 = vmatpush.bf16.msra.mxu0 %v2297
    %3665 = vmatpush.bf16.msra.mxu0 %v2290
    %3666 = vmatmul.bf16.gmra.mxu0 %v286
    %v3667 = vpop.f32.mrf.mxu0
    %v3668 = vadd.f32 %v3655, %v3667
    %v3669 = vpop.f32.mrf.mxu0
    %3670 = vdwg.mxu0
    %3671 = vmatpush.bf16.msra.mxu0 %v2395
    %3672 = vmatpush.bf16.msra.mxu0 %v2388
    %3673 = vmatpush.bf16.msra.mxu0 %v2381
    %3674 = vmatpush.bf16.msra.mxu0 %v2374
    %3675 = vmatpush.bf16.msra.mxu0 %v2367
    %3676 = vmatpush.bf16.msra.mxu0 %v2360
    %3677 = vmatpush.bf16.msra.mxu0 %v2353
    %3678 = vmatpush.bf16.msra.mxu0 %v2346
    %3679 = vmatmul.bf16.gmra.mxu0 %v287
    %v3680 = vpop.f32.mrf.mxu0
    %v3681 = vadd.f32 %v3668, %v3680
    %v3682 = vpop.f32.mrf.mxu0
    %3683 = vdwg.mxu0
    %3684 = vmatpush.bf16.msra.mxu0 %v2451
    %3685 = vmatpush.bf16.msra.mxu0 %v2444
    %3686 = vmatpush.bf16.msra.mxu0 %v2437
    %3687 = vmatpush.bf16.msra.mxu0 %v2430
    %3688 = vmatpush.bf16.msra.mxu0 %v2423
    %3689 = vmatpush.bf16.msra.mxu0 %v2416
    %3690 = vmatpush.bf16.msra.mxu0 %v2409
    %3691 = vmatpush.bf16.msra.mxu0 %v2402
    %3692 = vmatmul.bf16.gmra.mxu0 %v288
    %v3693 = vpop.f32.mrf.mxu0
    %v3694 = vadd.f32 %v3681, %v3693
    %v3695 = vpop.f32.mrf.mxu0
    %3696 = vdwg.mxu0
    %3697 = vmatpush.bf16.msra.mxu0 %v2507
    %3698 = vmatpush.bf16.msra.mxu0 %v2500
    %3699 = vmatpush.bf16.msra.mxu0 %v2493
    %3700 = vmatpush.bf16.msra.mxu0 %v2486
    %3701 = vmatpush.bf16.msra.mxu0 %v2479
    %3702 = vmatpush.bf16.msra.mxu0 %v2472
    %3703 = vmatpush.bf16.msra.mxu0 %v2465
    %3704 = vmatpush.bf16.msra.mxu0 %v2458
    %3705 = vmatmul.bf16.gmra.mxu0 %v289
    %v3706 = vpop.f32.mrf.mxu0
    %v3707 = vadd.f32 %v3694, %v3706
    %v3708 = vpop.f32.mrf.mxu0
    %3709 = vdwg.mxu0
    %3710 = vmatpush.bf16.msra.mxu0 %v2563
    %3711 = vmatpush.bf16.msra.mxu0 %v2556
    %3712 = vmatpush.bf16.msra.mxu0 %v2549
    %3713 = vmatpush.bf16.msra.mxu0 %v2542
    %3714 = vmatpush.bf16.msra.mxu0 %v2535
    %3715 = vmatpush.bf16.msra.mxu0 %v2528
    %3716 = vmatpush.bf16.msra.mxu0 %v2521
    %3717 = vmatpush.bf16.msra.mxu0 %v2514
    %3718 = vmatmul.bf16.gmra.mxu0 %v290
    %v3719 = vpop.f32.mrf.mxu0
    %v3720 = vadd.f32 %v3707, %v3719
    %v3721 = vpop.f32.mrf.mxu0
    %3722 = vdwg.mxu0
    %3723 = vmatpush.bf16.msra.mxu0 %v2619
    %3724 = vmatpush.bf16.msra.mxu0 %v2612
    %3725 = vmatpush.bf16.msra.mxu0 %v2605
    %3726 = vmatpush.bf16.msra.mxu0 %v2598
    %3727 = vmatpush.bf16.msra.mxu0 %v2591
    %3728 = vmatpush.bf16.msra.mxu0 %v2584
    %3729 = vmatpush.bf16.msra.mxu0 %v2577
    %3730 = vmatpush.bf16.msra.mxu0 %v2570
    %3731 = vmatmul.bf16.gmra.mxu0 %v291
    %v3732 = vpop.f32.mrf.mxu0
    %v3733 = vadd.f32 %v3720, %v3732
    %v3734 = vpop.f32.mrf.mxu0
    %3735 = vdwg.mxu0
    %3736 = vmatpush.bf16.msra.mxu0 %v2675
    %3737 = vmatpush.bf16.msra.mxu0 %v2668
    %3738 = vmatpush.bf16.msra.mxu0 %v2661
    %3739 = vmatpush.bf16.msra.mxu0 %v2654
    %3740 = vmatpush.bf16.msra.mxu0 %v2647
    %3741 = vmatpush.bf16.msra.mxu0 %v2640
    %3742 = vmatpush.bf16.msra.mxu0 %v2633
    %3743 = vmatpush.bf16.msra.mxu0 %v2626
    %3744 = vmatmul.bf16.gmra.mxu0 %v292
    %v3745 = vpop.f32.mrf.mxu0
    %v3746 = vadd.f32 %v3733, %v3745
    %v3747 = vpop.f32.mrf.mxu0
    %3748 = vdwg.mxu0
    %3749 = vmatpush.bf16.msra.mxu0 %v2284
    %3750 = vmatpush.bf16.msra.mxu0 %v2277
    %3751 = vmatpush.bf16.msra.mxu0 %v2270
    %3752 = vmatpush.bf16.msra.mxu0 %v2263
    %3753 = vmatpush.bf16.msra.mxu0 %v2256
    %3754 = vmatpush.bf16.msra.mxu0 %v2249
    %3755 = vmatpush.bf16.msra.mxu0 %v2242
    %3756 = vmatpush.bf16.msra.mxu0 %v2235
    %3757 = vmatmul.bf16.gmra.mxu0 %v285
    %v3758 = vpop.f32.mrf.mxu0
    %v3759 = vadd.f32 %v813, %v3758
    %v3760 = vpop.f32.mrf.mxu0
    %3761 = vdwg.mxu0
    %3762 = vmatpush.bf16.msra.mxu0 %v2340
    %3763 = vmatpush.bf16.msra.mxu0 %v2333
    %3764 = vmatpush.bf16.msra.mxu0 %v2326
    %3765 = vmatpush.bf16.msra.mxu0 %v2319
    %3766 = vmatpush.bf16.msra.mxu0 %v2312
    %3767 = vmatpush.bf16.msra.mxu0 %v2305
    %3768 = vmatpush.bf16.msra.mxu0 %v2298
    %3769 = vmatpush.bf16.msra.mxu0 %v2291
    %3770 = vmatmul.bf16.gmra.mxu0 %v286
    %v3771 = vpop.f32.mrf.mxu0
    %v3772 = vadd.f32 %v3759, %v3771
    %v3773 = vpop.f32.mrf.mxu0
    %3774 = vdwg.mxu0
    %3775 = vmatpush.bf16.msra.mxu0 %v2396
    %3776 = vmatpush.bf16.msra.mxu0 %v2389
    %3777 = vmatpush.bf16.msra.mxu0 %v2382
    %3778 = vmatpush.bf16.msra.mxu0 %v2375
    %3779 = vmatpush.bf16.msra.mxu0 %v2368
    %3780 = vmatpush.bf16.msra.mxu0 %v2361
    %3781 = vmatpush.bf16.msra.mxu0 %v2354
    %3782 = vmatpush.bf16.msra.mxu0 %v2347
    %3783 = vmatmul.bf16.gmra.mxu0 %v287
    %v3784 = vpop.f32.mrf.mxu0
    %v3785 = vadd.f32 %v3772, %v3784
    %v3786 = vpop.f32.mrf.mxu0
    %3787 = vdwg.mxu0
    %3788 = vmatpush.bf16.msra.mxu0 %v2452
    %3789 = vmatpush.bf16.msra.mxu0 %v2445
    %3790 = vmatpush.bf16.msra.mxu0 %v2438
    %3791 = vmatpush.bf16.msra.mxu0 %v2431
    %3792 = vmatpush.bf16.msra.mxu0 %v2424
    %3793 = vmatpush.bf16.msra.mxu0 %v2417
    %3794 = vmatpush.bf16.msra.mxu0 %v2410
    %3795 = vmatpush.bf16.msra.mxu0 %v2403
    %3796 = vmatmul.bf16.gmra.mxu0 %v288
    %v3797 = vpop.f32.mrf.mxu0
    %v3798 = vadd.f32 %v3785, %v3797
    %v3799 = vpop.f32.mrf.mxu0
    %3800 = vdwg.mxu0
    %3801 = vmatpush.bf16.msra.mxu0 %v2508
    %3802 = vmatpush.bf16.msra.mxu0 %v2501
    %3803 = vmatpush.bf16.msra.mxu0 %v2494
    %3804 = vmatpush.bf16.msra.mxu0 %v2487
    %3805 = vmatpush.bf16.msra.mxu0 %v2480
    %3806 = vmatpush.bf16.msra.mxu0 %v2473
    %3807 = vmatpush.bf16.msra.mxu0 %v2466
    %3808 = vmatpush.bf16.msra.mxu0 %v2459
    %3809 = vmatmul.bf16.gmra.mxu0 %v289
    %v3810 = vpop.f32.mrf.mxu0
    %v3811 = vadd.f32 %v3798, %v3810
    %v3812 = vpop.f32.mrf.mxu0
    %3813 = vdwg.mxu0
    %3814 = vmatpush.bf16.msra.mxu0 %v2564
    %3815 = vmatpush.bf16.msra.mxu0 %v2557
    %3816 = vmatpush.bf16.msra.mxu0 %v2550
    %3817 = vmatpush.bf16.msra.mxu0 %v2543
    %3818 = vmatpush.bf16.msra.mxu0 %v2536
    %3819 = vmatpush.bf16.msra.mxu0 %v2529
    %3820 = vmatpush.bf16.msra.mxu0 %v2522
    %3821 = vmatpush.bf16.msra.mxu0 %v2515
    %3822 = vmatmul.bf16.gmra.mxu0 %v290
    %v3823 = vpop.f32.mrf.mxu0
    %v3824 = vadd.f32 %v3811, %v3823
    %v3825 = vpop.f32.mrf.mxu0
    %3826 = vdwg.mxu0
    %3827 = vmatpush.bf16.msra.mxu0 %v2620
    %3828 = vmatpush.bf16.msra.mxu0 %v2613
    %3829 = vmatpush.bf16.msra.mxu0 %v2606
    %3830 = vmatpush.bf16.msra.mxu0 %v2599
    %3831 = vmatpush.bf16.msra.mxu0 %v2592
    %3832 = vmatpush.bf16.msra.mxu0 %v2585
    %3833 = vmatpush.bf16.msra.mxu0 %v2578
    %3834 = vmatpush.bf16.msra.mxu0 %v2571
    %3835 = vmatmul.bf16.gmra.mxu0 %v291
    %v3836 = vpop.f32.mrf.mxu0
    %v3837 = vadd.f32 %v3824, %v3836
    %v3838 = vpop.f32.mrf.mxu0
    %3839 = vdwg.mxu0
    %3840 = vmatpush.bf16.msra.mxu0 %v2676
    %3841 = vmatpush.bf16.msra.mxu0 %v2669
    %3842 = vmatpush.bf16.msra.mxu0 %v2662
    %3843 = vmatpush.bf16.msra.mxu0 %v2655
    %3844 = vmatpush.bf16.msra.mxu0 %v2648
    %3845 = vmatpush.bf16.msra.mxu0 %v2641
    %3846 = vmatpush.bf16.msra.mxu0 %v2634
    %3847 = vmatpush.bf16.msra.mxu0 %v2627
    %3848 = vmatmul.bf16.gmra.mxu0 %v292
    %v3849 = vpop.f32.mrf.mxu0
    %v3850 = vadd.f32 %v3837, %v3849
    %v3851 = vpop.f32.mrf.mxu0
    %3852 = vdwg.mxu0
    %v3853 = vmul.f32 %v3226, 0.5
    %v3854 = vmul.f32 %v3330, 0.5
    %v3855 = vmul.f32 %v3434, 0.5
    %v3856 = vmul.f32 %v3538, 0.5
    %v3857 = vmul.f32 %v3642, 0.5
    %v3858 = vmul.f32 %v3746, 0.5
    %v3859 = vmul.f32 %v3850, 0.5
    %v3860 = vtanh.pop %v3853
    %v3861 = vtanh.pop %v3854
    %v3862 = vtanh.pop %v3855
    %v3863 = vtanh.pop %v3856
    %v3864 = vtanh.pop %v3857
    %v3865 = vtanh.pop %v3858
    %v3866 = vtanh.pop %v3859
    %v3867 = vadd.f32 %v3860, 1.0
    %v3868 = vadd.f32 %v3861, 1.0
    %v3869 = vadd.f32 %v3862, 1.0
    %v3870 = vadd.f32 %v3863, 1.0
    %v3871 = vadd.f32 %v3864, 1.0
    %v3872 = vadd.f32 %v3865, 1.0
    %v3873 = vadd.f32 %v3866, 1.0
    %v3874 = vmul.f32 %v3867, 0.5
    %v3875 = vmul.f32 %v3868, 0.5
    %v3876 = vmul.f32 %v3869, 0.5
    %v3877 = vmul.f32 %v3870, 0.5
    %v3878 = vmul.f32 %v3871, 0.5
    %v3879 = vmul.f32 %v3872, 0.5
    %v3880 = vmul.f32 %v3873, 0.5
    %3881 = vst [vmem:[#allocation2] sm:$0xff] %v3874
    %3882 = vst [vmem:[#allocation2 + $0x8] sm:$0xff] %v3875
    %3883 = vst [vmem:[#allocation2 + $0x10] sm:$0xff] %v3876
    %3884 = vst [vmem:[#allocation2 + $0x18] sm:$0xff] %v3877
    %3885 = vst [vmem:[#allocation2 + $0x20] sm:$0xff] %v3878
    %3886 = vst [vmem:[#allocation2 + $0x28] sm:$0xff] %v3879
    %vm3887 = vcmask 130048
    %3888 = vst.msk [vmem:[#allocation2 + $0x30] sm:$0xff] %vm3887, %v3880
    // Predicated region
    $region22: #{tpu_custom_call.1} parent=1 // pred_check
      _
    $region23: #{tpu_custom_call.1} parent=1 // pred_check_branch
      %3890 = sbr.rel (0) target = $region25
    $region24: #{tpu_custom_call.1} parent=1 // pred_region
      %3892 = vsyncadd [#allocation3], 0
      %s3894 = sshll.u32 [#allocation2], 4
      %s3895 = int_to_ptr.vmem [resolvable:$true] %s3894
      %s3896 = sshll.u32 %s5, 4
      %s3897 = int_to_ptr.hbm [resolvable:$true] %s3896
      %3899 = dma.vmem_to_hbm [thread:$0]  %s3895, 896, %s3897, [#allocation3]
    $region25: #{tpu_custom_call.1} parent=1 // pred_fallthru
      _
    // Predicated region
    $region26: #{tpu_custom_call.1} parent=1 // pred_check
      _
    $region27: #{tpu_custom_call.1} parent=1 // pred_check_branch
      %3901 = sbr.rel (0) target = $region29
    $region28: #{tpu_custom_call.1} parent=1 // pred_region
      %3903 = dma.done [#allocation3], 896
    $region29: #{tpu_custom_call.1} parent=1 // pred_fallthru
      _
    %3904 = vsyncpa [#allocation3], 1

</llo_original>
